<compile_context>
chip_gen: v7x
topology: tpu7x:2x2x1
jax: 0.10.0
libtpu: 0.0.40
codegen_flags: <defaults>
</compile_context>

<pallas_src>
import numpy as np
import jax
import jax.numpy as jnp
from jax.experimental import pallas as pl
from jax.experimental.pallas import tpu as pltpu

SIZES = (1, 2, 3, 6)
S_TOTAL = sum(s * s for s in SIZES)            # 50 pooled pixels over all scales


def _round_up(x, m):
    return ((x + m - 1) // m) * m


S_PAD = _round_up(S_TOTAL, 16)                 # 64: bf16 sublane-pack friendly


# ---------------------------------------------------------------------------
# Static spatial operators (glue, numpy)
# ---------------------------------------------------------------------------
def adaptive_pool_matrix(in_size, out_size):
    """P[i, h] s.t. pooled[i] = sum_h P[i,h] * x[h]  (PyTorch AdaptiveAvgPool)."""
    P = np.zeros((out_size, in_size), np.float32)
    for i in range(out_size):
        start = (i * in_size) // out_size
        end = -(-((i + 1) * in_size) // out_size)      # ceil div
        P[i, start:end] = 1.0 / float(end - start)
    return P


def bilinear_matrix(out_size, in_size):
    """U[d, i] s.t. up[d] = sum_i U[d,i] * x[i]; PyTorch bilinear, align_corners=False."""
    U = np.zeros((out_size, in_size), np.float32)
    if in_size == 1:
        U[:, 0] = 1.0
        return U
    scale = in_size / out_size
    for d in range(out_size):
        src = max((d + 0.5) * scale - 0.5, 0.0)
        i0 = min(int(np.floor(src)), in_size - 1)
        i1 = min(i0 + 1, in_size - 1)
        lam = src - i0
        U[d, i0] += 1.0 - lam
        U[d, i1] += lam
    return U


# ---------------------------------------------------------------------------
# Pass 1: pooled_cat = Q_cat @ x  (accumulated over HW tiles), then the tiny
#         per-scale 1x1 convs folded through the matching bottleneck slice:
#         stacked[rows of scale k] = relu(pooled_k @ Ws_k + bs_k) @ Wbs_k
# ---------------------------------------------------------------------------
def _pool_stage_kernel(x_ref, qcat_ref, ws_ref, bs_ref, wbs_ref,
                       stacked_ref, acc_ref):
    t = pl.program_id(1)

    @pl.when(t == 0)
    def _init():
        acc_ref[...] = jnp.zeros_like(acc_ref)

    # (S_PAD, tile_hw) @ (tile_hw, C_pad) -> f32 accumulator
    acc_ref[...] += jnp.dot(qcat_ref[...], x_ref[...],
                            preferred_element_type=jnp.float32)

    @pl.when(t == pl.num_programs(1) - 1)
    def _finalize():
        pooled = acc_ref[...].astype(jnp.bfloat16)                  # (S_PAD, C_pad)
        row = jax.lax.broadcasted_iota(jnp.int32, (pooled.shape[0], 1), 0)
        out = jnp.zeros((pooled.shape[0], stacked_ref.shape[-1]), jnp.float32)
        off = 0
        for k, s in enumerate(SIZES):
            n = s * s
            # stage 1x1 conv + bias + relu (tiny: <= 64 x CH_pad)
            z = jnp.dot(pooled, ws_ref[k],
                        preferred_element_type=jnp.float32) + bs_ref[k]
            z = jnp.maximum(z, 0.0).astype(jnp.bfloat16)
            # fold through this stage's bottleneck slice (reassociated epilogue)
            small = jnp.dot(z, wbs_ref[k], preferred_element_type=jnp.float32)
            mask = (row >= off) & (row < off + n)
            out = out + jnp.where(mask, small, 0.0)
            off += n
        stacked_ref[...] = out.astype(stacked_ref.dtype)


# ---------------------------------------------------------------------------
# Pass 2 (apply, tiled over N x HW tiles, both axes parallel):
#   out_tile = relu(x_tile @ Wbx + R_cat_tile @ stacked + bb)
# ---------------------------------------------------------------------------
def _apply_kernel(x_ref, rcat_ref, stacked_ref, wbx_ref, bb_ref, out_ref):
    acc = jnp.dot(x_ref[...], wbx_ref[...], preferred_element_type=jnp.float32)
    acc = acc + jnp.dot(rcat_ref[...], stacked_ref[...],
                        preferred_element_type=jnp.float32)
    acc = acc + bb_ref[...]
    out_ref[...] = jnp.maximum(acc, 0.0).astype(out_ref.dtype)


# ---------------------------------------------------------------------------
# Wrapper
# ---------------------------------------------------------------------------
def pyramid_pooling_forward(feats_nchw, params, *, tile_hw_target=512):
    N, C, H, W = feats_nchw.shape
    HW = H * W
    ch = params["stages"][0][0].shape[1]
    n_sizes = len(SIZES)

    # lane-dense channel padding, 128-aligned HW tiles
    C_pad = _round_up(C, 128)
    CH_pad = _round_up(ch, 128)
    hw128 = _round_up(HW, 128)
    tile_hw = hw128 if hw128 <= tile_hw_target else _round_up(tile_hw_target, 128)
    HW_pad = _round_up(HW, tile_hw)
    num_t = HW_pad // tile_hw

    # ---- activations: NCHW -> (N, HW_pad, C_pad) bf16, channels on lanes ----
    x = jnp.transpose(feats_nchw, (0, 2, 3, 1)).reshape(N, HW, C)
    x_p = jnp.zeros((N, HW_pad, C_pad), jnp.bfloat16)
    x_p = x_p.at[:, :HW, :C].set(x.astype(jnp.bfloat16))

    # ---- fused spatial operators: Q_cat (S_PAD, HW_pad), R_cat (HW_pad, S_PAD)
    q_np = np.zeros((S_PAD, HW_pad), np.float32)
    r_np = np.zeros((HW_pad, S_PAD), np.float32)
    off = 0
    for s in SIZES:
        Ph, Pw = adaptive_pool_matrix(H, s), adaptive_pool_matrix(W, s)
        Uh, Uw = bilinear_matrix(H, s), bilinear_matrix(W, s)
        q_np[off:off + s * s, :HW] = np.kron(Ph, Pw)
        r_np[:HW, off:off + s * s] = np.kron(Uh, Uw)
        off += s * s
    q_cat = jnp.asarray(q_np, jnp.bfloat16)
    r_cat = jnp.asarray(r_np, jnp.bfloat16)

    # ---- padded weights (bf16 operands, f32 biases) ----
    def pad_to(a, shape, dtype):
        out = jnp.zeros(shape, dtype)
        return out.at[tuple(slice(0, d) for d in a.shape)].set(a.astype(dtype))

    Wb = params["Wb"]
    ws_all = jnp.stack([pad_to(params["stages"][k][0], (C_pad, CH_pad), jnp.bfloat16)
                        for k in range(n_sizes)])
    bs_all = jnp.stack([pad_to(params["stages"][k][1].reshape(1, -1), (1, CH_pad),
                               jnp.float32) for k in range(n_sizes)])
    wbs_all = jnp.stack([pad_to(Wb[k * ch:(k + 1) * ch, :], (CH_pad, C_pad),
                                jnp.bfloat16) for k in range(n_sizes)])
    wbx = pad_to(Wb[n_sizes * ch:, :], (C_pad, C_pad), jnp.bfloat16)
    bb = pad_to(params["bb"].reshape(1, -1), (1, C_pad), jnp.float32)

    # ---- pass 1: pooling + per-scale convs + bottleneck slices ----
    stacked = pl.pallas_call(
        _pool_stage_kernel,
        out_shape=jax.ShapeDtypeStruct((N, S_PAD, C_pad), jnp.bfloat16),
        grid=(N, num_t),
        in_specs=[
            pl.BlockSpec((None, tile_hw, C_pad), lambda n, t: (n, t, 0)),
            pl.BlockSpec((S_PAD, tile_hw), lambda n, t: (0, t)),
            pl.BlockSpec((n_sizes, C_pad, CH_pad), lambda n, t: (0, 0, 0)),
            pl.BlockSpec((n_sizes, 1, CH_pad), lambda n, t: (0, 0, 0)),
            pl.BlockSpec((n_sizes, CH_pad, C_pad), lambda n, t: (0, 0, 0)),
        ],
        out_specs=pl.BlockSpec((None, S_PAD, C_pad), lambda n, t: (n, 0, 0)),
        scratch_shapes=[pltpu.VMEM((S_PAD, C_pad), jnp.float32)],
        compiler_params=pltpu.CompilerParams(
            dimension_semantics=("parallel", "arbitrary")),
    )(x_p, q_cat, ws_all, bs_all, wbs_all)

    # ---- pass 2: identity bottleneck + fused upsample-apply + ReLU ----
    out_p = pl.pallas_call(
        _apply_kernel,
        out_shape=jax.ShapeDtypeStruct((N, HW_pad, C_pad), jnp.float32),
        grid=(N, num_t),
        in_specs=[
            pl.BlockSpec((None, tile_hw, C_pad), lambda n, t: (n, t, 0)),
            pl.BlockSpec((tile_hw, S_PAD), lambda n, t: (t, 0)),
            pl.BlockSpec((None, S_PAD, C_pad), lambda n, t: (n, 0, 0)),
            pl.BlockSpec((C_pad, C_pad), lambda n, t: (0, 0)),
            pl.BlockSpec((1, C_pad), lambda n, t: (0, 0)),
        ],
        out_specs=pl.BlockSpec((None, tile_hw, C_pad), lambda n, t: (n, t, 0)),
        compiler_params=pltpu.CompilerParams(
            dimension_semantics=("parallel", "parallel")),
    )(x_p, r_cat, stacked, wbx, bb)

    out = out_p[:, :HW, :C].reshape(N, H, W, C)
    return jnp.transpose(out, (0, 3, 1, 2))      # back to NCHW


# ---------------------------------------------------------------------------
# Deterministic synthetic parameters (shapes from the module __init__)
# ---------------------------------------------------------------------------
def init_params(key, c_in, ch, sizes=SIZES):
    ks = jax.random.split(key, 2 * len(sizes) + 2)
    stages = []
    for i, _ in enumerate(sizes):
        Wsi = 0.1 * jax.random.normal(ks[2 * i], (c_in, ch), jnp.float32)       # Conv2d(c_in, ch, 1)
        bsi = 0.1 * jax.random.normal(ks[2 * i + 1], (1, ch), jnp.float32)
        stages.append((Wsi, bsi))
    Wb = 0.1 * jax.random.normal(ks[-2], (len(sizes) * ch + c_in, c_in), jnp.float32)  # bottleneck 1x1
    bb = 0.1 * jax.random.normal(ks[-1], (1, c_in), jnp.float32)
    return {"stages": stages, "Wb": Wb, "bb": bb}


# ---------------------------------------------------------------------------
# Pure-JAX reference (concat-then-bottleneck path).  Matmul operands are cast
# to bf16 with f32 accumulation to mirror the kernel's dtype policy (pooling
# weights like 1/6 are inexact in bf16), so the check isolates the structural
# transformation (fusion + reassociation), not the dtype choice.
# ---------------------------------------------------------------------------
def reference_forward(feats_nchw, params):
    N, C, H, W = feats_nchw.shape
    HW = H * W
    f32, bf16 = jnp.float32, jnp.bfloat16
    x = jnp.transpose(feats_nchw, (0, 2, 3, 1)).reshape(N, HW, C).astype(bf16)
    priors = []
    for k, s in enumerate(SIZES):
        Ph, Pw = adaptive_pool_matrix(H, s), adaptive_pool_matrix(W, s)
        Uh, Uw = bilinear_matrix(H, s), bilinear_matrix(W, s)
        Q = jnp.asarray(np.kron(Ph, Pw), bf16)
        R = jnp.asarray(np.kron(Uh, Uw), bf16)
        Ws, bs = params["stages"][k]
        pooled = jnp.einsum("pq,nqc->npc", Q, x, preferred_element_type=f32)
        z = jax.nn.relu(jnp.einsum("npc,cd->npd", pooled.astype(bf16),
                                   Ws.astype(bf16),
                                   preferred_element_type=f32) + bs)
        priors.append(jnp.einsum("qp,npd->nqd", R, z.astype(bf16),
                                 preferred_element_type=f32))
    priors.append(x.astype(f32))
    cat = jnp.concatenate(priors, axis=-1)
    out = jax.nn.relu(jnp.einsum("nqc,cd->nqd", cat.astype(bf16),
                                 params["Wb"].astype(bf16),
                                 preferred_element_type=f32) + params["bb"])
    return jnp.transpose(out.reshape(N, H, W, C), (0, 3, 1, 2))


if __name__ == "__main__":
    key = jax.random.PRNGKey(0)
    k_feat, k_par = jax.random.split(key)

    N, C_in, H, W = 2, 4, 16, 16     # small shapes consistent with the module
    CHANNELS = 8                     # stands in for the default 512

    feats = jax.random.normal(k_feat, (N, C_in, H, W), jnp.float32)
    params = init_params(k_par, C_in, CHANNELS)

    out = pyramid_pooling_forward(feats, params)
    jax.block_until_ready(out)

    ref = reference_forward(feats, params)
    assert out.shape == (N, C_in, H, W)
    max_err = float(jnp.max(jnp.abs(out - ref)))
    assert jnp.allclose(out, ref, atol=2e-2, rtol=2e-2), \
        f"mismatch vs JAX reference (max abs err {max_err})"

    print("KERNEL_OK")
</pallas_src>

<mosaic_0001>
module attributes {stable_mosaic.version = 11 : i64} {
  func.func @_pool_stage_kernel(%arg0: i32, %arg1: i32, %arg2: memref<1x256x128xbf16, #tpu.memory_space<vmem>>, %arg3: memref<64x256xbf16, #tpu.memory_space<vmem>>, %arg4: memref<4x128x128xbf16, #tpu.memory_space<vmem>>, %arg5: memref<4x1x128xf32, #tpu.memory_space<vmem>>, %arg6: memref<4x128x128xbf16, #tpu.memory_space<vmem>>, %arg7: memref<1x64x128xbf16, #tpu.memory_space<vmem>>, %arg8: memref<64x128xf32, #tpu.memory_space<vmem>>) attributes {dimension_semantics = [#tpu.dimension_semantics<parallel>, #tpu.dimension_semantics<arbitrary>], iteration_bounds = array<i64: 2, 1>, scalar_prefetch = 0 : i64, scratch_operands = 1 : i64, tpu.core_type = #tpu.core_type<tc>, window_params = [{transform_indices = @transform_0, window_bounds = array<i64: 1, 256, 128>}, {transform_indices = @transform_1, window_bounds = array<i64: 64, 256>}, {pipeline_mode = #tpu.pipeline_mode<synchronous>, transform_indices = @transform_2, window_bounds = array<i64: 4, 128, 128>}, {pipeline_mode = #tpu.pipeline_mode<synchronous>, transform_indices = @transform_3, window_bounds = array<i64: 4, 1, 128>}, {pipeline_mode = #tpu.pipeline_mode<synchronous>, transform_indices = @transform_4, window_bounds = array<i64: 4, 128, 128>}, {transform_indices = @transform_5, window_bounds = array<i64: 1, 64, 128>}]} {
    %c0_i32 = arith.constant 0 : i32
    %0 = arith.cmpi eq, %arg1, %c0_i32 : i32
    %1 = arith.extui %0 : i1 to i32
    %c0_i32_0 = arith.constant 0 : i32
    %2 = arith.cmpi ne, %1, %c0_i32_0 : i32
    scf.if %2 {
      %cst_11 = arith.constant 0.000000e+00 : f32
      %13 = vector.broadcast %cst_11 : f32 to vector<64x128xf32>
      %c0_12 = arith.constant 0 : index
      %c0_13 = arith.constant 0 : index
      %14 = vector.load %arg8[%c0_12, %c0_13] : memref<64x128xf32, #tpu.memory_space<vmem>>, vector<64x128xf32>
      tpu.vector_store %arg8[%c0_12, %c0_13], %13 {strides = array<i32>} : memref<64x128xf32, #tpu.memory_space<vmem>>, vector<64x128xf32>,
    } else {
    }
    %c0 = arith.constant 0 : index
    %c0_1 = arith.constant 0 : index
    %3 = vector.load %arg8[%c0, %c0_1] : memref<64x128xf32, #tpu.memory_space<vmem>>, vector<64x128xf32>
    %c0_2 = arith.constant 0 : index
    %c0_3 = arith.constant 0 : index
    %4 = vector.load %arg3[%c0_2, %c0_3] : memref<64x256xbf16, #tpu.memory_space<vmem>>, vector<64x256xbf16>
    %c0_4 = arith.constant 0 : index
    %c0_5 = arith.constant 0 : index
    %c0_6 = arith.constant 0 : index
    %5 = vector.load %arg2[%c0_4, %c0_5, %c0_6] : memref<1x256x128xbf16, #tpu.memory_space<vmem>>, vector<1x256x128xbf16>
    %6 = vector.shape_cast %5 : vector<1x256x128xbf16> to vector<256x128xbf16>
    %cst = arith.constant dense<0.000000e+00> : vector<64x128xf32>
    %7 = tpu.matmul %4, %6, %cst {dimension_numbers = #tpu.dot_dimension_numbers<[1], [0], [0], [1], [0, 0, 1, 1], [], []>} : vector<64x256xbf16>, vector<256x128xbf16>, vector<64x128xf32> -> vector<64x128xf32>
    %8 = arith.addf %3, %7 : vector<64x128xf32>
    %c0_7 = arith.constant 0 : index
    %c0_8 = arith.constant 0 : index
    %9 = vector.load %arg8[%c0_7, %c0_8] : memref<64x128xf32, #tpu.memory_space<vmem>>, vector<64x128xf32>
    tpu.vector_store %arg8[%c0_7, %c0_8], %8 {strides = array<i32>} : memref<64x128xf32, #tpu.memory_space<vmem>>, vector<64x128xf32>,
    %c0_i32_9 = arith.constant 0 : i32
    %10 = arith.cmpi eq, %arg1, %c0_i32_9 : i32
    %11 = arith.extui %10 : i1 to i32
    %c0_i32_10 = arith.constant 0 : i32
    %12 = arith.cmpi ne, %11, %c0_i32_10 : i32
    scf.if %12 {
      %c0_11 = arith.constant 0 : index
      %c0_12 = arith.constant 0 : index
      %13 = vector.load %arg8[%c0_11, %c0_12] : memref<64x128xf32, #tpu.memory_space<vmem>>, vector<64x128xf32>
      %14 = arith.truncf %13 : vector<64x128xf32> to vector<64x128xbf16>
      %15 = tpu.iota {dimensions = array<i32: 0>} : vector<64x1xi32>
      %cst_13 = arith.constant 0.000000e+00 : f32
      %16 = vector.broadcast %cst_13 : f32 to vector<64x128xf32>
      %c0_14 = arith.constant 0 : index
      %c0_15 = arith.constant 0 : index
      %c0_16 = arith.constant 0 : index
      %17 = vector.load %arg4[%c0_14, %c0_15, %c0_16] : memref<4x128x128xbf16, #tpu.memory_space<vmem>>, vector<1x128x128xbf16>
      %18 = vector.shape_cast %17 : vector<1x128x128xbf16> to vector<128x128xbf16>
      %cst_17 = arith.constant dense<0.000000e+00> : vector<64x128xf32>
      %19 = tpu.matmul %14, %18, %cst_17 {dimension_numbers = #tpu.dot_dimension_numbers<[1], [0], [0], [1], [0, 0, 1, 1], [], []>} : vector<64x128xbf16>, vector<128x128xbf16>, vector<64x128xf32> -> vector<64x128xf32>
      %c0_18 = arith.constant 0 : index
      %c0_19 = arith.constant 0 : index
      %c0_20 = arith.constant 0 : index
      %20 = vector.load %arg5[%c0_18, %c0_19, %c0_20] : memref<4x1x128xf32, #tpu.memory_space<vmem>>, vector<1x1x128xf32>
      %21 = vector.shape_cast %20 : vector<1x1x128xf32> to vector<1x128xf32>
      %22 = vector.broadcast %21 : vector<1x128xf32> to vector<64x128xf32>
      %23 = arith.addf %19, %22 : vector<64x128xf32>
      %cst_21 = arith.constant 0.000000e+00 : f32
      %24 = vector.broadcast %cst_21 : f32 to vector<64x128xf32>
      %25 = arith.maximumf %23, %24 : vector<64x128xf32>
      %26 = arith.truncf %25 : vector<64x128xf32> to vector<64x128xbf16>
      %c0_22 = arith.constant 0 : index
      %c0_23 = arith.constant 0 : index
      %c0_24 = arith.constant 0 : index
      %27 = vector.load %arg6[%c0_22, %c0_23, %c0_24] : memref<4x128x128xbf16, #tpu.memory_space<vmem>>, vector<1x128x128xbf16>
      %28 = vector.shape_cast %27 : vector<1x128x128xbf16> to vector<128x128xbf16>
      %cst_25 = arith.constant dense<0.000000e+00> : vector<64x128xf32>
      %29 = tpu.matmul %26, %28, %cst_25 {dimension_numbers = #tpu.dot_dimension_numbers<[1], [0], [0], [1], [0, 0, 1, 1], [], []>} : vector<64x128xbf16>, vector<128x128xbf16>, vector<64x128xf32> -> vector<64x128xf32>
      %c0_i32_26 = arith.constant 0 : i32
      %30 = vector.broadcast %c0_i32_26 : i32 to vector<64x1xi32>
      %31 = arith.cmpi sge, %15, %30 : vector<64x1xi32>
      %c1_i32 = arith.constant 1 : i32
      %32 = vector.broadcast %c1_i32 : i32 to vector<64x1xi32>
      %33 = arith.cmpi slt, %15, %32 : vector<64x1xi32>
      %34 = arith.andi %31, %33 : vector<64x1xi1>
      %cst_27 = arith.constant 0.000000e+00 : f32
      %35 = vector.shape_cast %34 : vector<64x1xi1> to vector<64x1xi1>
      %36 = vector.broadcast %35 : vector<64x1xi1> to vector<64x128xi1>
      %37 = vector.broadcast %cst_27 : f32 to vector<64x128xf32>
      %38 = arith.select %36, %29, %37 : vector<64x128xi1>, vector<64x128xf32>
      %39 = arith.addf %16, %38 : vector<64x128xf32>
      %c1 = arith.constant 1 : index
      %c0_28 = arith.constant 0 : index
      %c0_29 = arith.constant 0 : index
      %40 = vector.load %arg4[%c1, %c0_28, %c0_29] : memref<4x128x128xbf16, #tpu.memory_space<vmem>>, vector<1x128x128xbf16>
      %41 = vector.shape_cast %40 : vector<1x128x128xbf16> to vector<128x128xbf16>
      %cst_30 = arith.constant dense<0.000000e+00> : vector<64x128xf32>
      %42 = tpu.matmul %14, %41, %cst_30 {dimension_numbers = #tpu.dot_dimension_numbers<[1], [0], [0], [1], [0, 0, 1, 1], [], []>} : vector<64x128xbf16>, vector<128x128xbf16>, vector<64x128xf32> -> vector<64x128xf32>
      %c1_31 = arith.constant 1 : index
      %c0_32 = arith.constant 0 : index
      %c0_33 = arith.constant 0 : index
      %43 = vector.load %arg5[%c1_31, %c0_32, %c0_33] : memref<4x1x128xf32, #tpu.memory_space<vmem>>, vector<1x1x128xf32>
      %44 = vector.shape_cast %43 : vector<1x1x128xf32> to vector<1x128xf32>
      %45 = vector.broadcast %44 : vector<1x128xf32> to vector<64x128xf32>
      %46 = arith.addf %42, %45 : vector<64x128xf32>
      %cst_34 = arith.constant 0.000000e+00 : f32
      %47 = vector.broadcast %cst_34 : f32 to vector<64x128xf32>
      %48 = arith.maximumf %46, %47 : vector<64x128xf32>
      %49 = arith.truncf %48 : vector<64x128xf32> to vector<64x128xbf16>
      %c1_35 = arith.constant 1 : index
      %c0_36 = arith.constant 0 : index
      %c0_37 = arith.constant 0 : index
      %50 = vector.load %arg6[%c1_35, %c0_36, %c0_37] : memref<4x128x128xbf16, #tpu.memory_space<vmem>>, vector<1x128x128xbf16>
      %51 = vector.shape_cast %50 : vector<1x128x128xbf16> to vector<128x128xbf16>
      %cst_38 = arith.constant dense<0.000000e+00> : vector<64x128xf32>
      %52 = tpu.matmul %49, %51, %cst_38 {dimension_numbers = #tpu.dot_dimension_numbers<[1], [0], [0], [1], [0, 0, 1, 1], [], []>} : vector<64x128xbf16>, vector<128x128xbf16>, vector<64x128xf32> -> vector<64x128xf32>
      %c1_i32_39 = arith.constant 1 : i32
      %53 = vector.broadcast %c1_i32_39 : i32 to vector<64x1xi32>
      %54 = arith.cmpi sge, %15, %53 : vector<64x1xi32>
      %c5_i32 = arith.constant 5 : i32
      %55 = vector.broadcast %c5_i32 : i32 to vector<64x1xi32>
      %56 = arith.cmpi slt, %15, %55 : vector<64x1xi32>
      %57 = arith.andi %54, %56 : vector<64x1xi1>
      %cst_40 = arith.constant 0.000000e+00 : f32
      %58 = vector.shape_cast %57 : vector<64x1xi1> to vector<64x1xi1>
      %59 = vector.broadcast %58 : vector<64x1xi1> to vector<64x128xi1>
      %60 = vector.broadcast %cst_40 : f32 to vector<64x128xf32>
      %61 = arith.select %59, %52, %60 : vector<64x128xi1>, vector<64x128xf32>
      %62 = arith.addf %39, %61 : vector<64x128xf32>
      %c2 = arith.constant 2 : index
      %c0_41 = arith.constant 0 : index
      %c0_42 = arith.constant 0 : index
      %63 = vector.load %arg4[%c2, %c0_41, %c0_42] : memref<4x128x128xbf16, #tpu.memory_space<vmem>>, vector<1x128x128xbf16>
      %64 = vector.shape_cast %63 : vector<1x128x128xbf16> to vector<128x128xbf16>
      %cst_43 = arith.constant dense<0.000000e+00> : vector<64x128xf32>
      %65 = tpu.matmul %14, %64, %cst_43 {dimension_numbers = #tpu.dot_dimension_numbers<[1], [0], [0], [1], [0, 0, 1, 1], [], []>} : vector<64x128xbf16>, vector<128x128xbf16>, vector<64x128xf32> -> vector<64x128xf32>
      %c2_44 = arith.constant 2 : index
      %c0_45 = arith.constant 0 : index
      %c0_46 = arith.constant 0 : index
      %66 = vector.load %arg5[%c2_44, %c0_45, %c0_46] : memref<4x1x128xf32, #tpu.memory_space<vmem>>, vector<1x1x128xf32>
      %67 = vector.shape_cast %66 : vector<1x1x128xf32> to vector<1x128xf32>
      %68 = vector.broadcast %67 : vector<1x128xf32> to vector<64x128xf32>
      %69 = arith.addf %65, %68 : vector<64x128xf32>
      %cst_47 = arith.constant 0.000000e+00 : f32
      %70 = vector.broadcast %cst_47 : f32 to vector<64x128xf32>
      %71 = arith.maximumf %69, %70 : vector<64x128xf32>
      %72 = arith.truncf %71 : vector<64x128xf32> to vector<64x128xbf16>
      %c2_48 = arith.constant 2 : index
      %c0_49 = arith.constant 0 : index
      %c0_50 = arith.constant 0 : index
      %73 = vector.load %arg6[%c2_48, %c0_49, %c0_50] : memref<4x128x128xbf16, #tpu.memory_space<vmem>>, vector<1x128x128xbf16>
      %74 = vector.shape_cast %73 : vector<1x128x128xbf16> to vector<128x128xbf16>
      %cst_51 = arith.constant dense<0.000000e+00> : vector<64x128xf32>
      %75 = tpu.matmul %72, %74, %cst_51 {dimension_numbers = #tpu.dot_dimension_numbers<[1], [0], [0], [1], [0, 0, 1, 1], [], []>} : vector<64x128xbf16>, vector<128x128xbf16>, vector<64x128xf32> -> vector<64x128xf32>
      %c5_i32_52 = arith.constant 5 : i32
      %76 = vector.broadcast %c5_i32_52 : i32 to vector<64x1xi32>
      %77 = arith.cmpi sge, %15, %76 : vector<64x1xi32>
      %c14_i32 = arith.constant 14 : i32
      %78 = vector.broadcast %c14_i32 : i32 to vector<64x1xi32>
      %79 = arith.cmpi slt, %15, %78 : vector<64x1xi32>
      %80 = arith.andi %77, %79 : vector<64x1xi1>
      %cst_53 = arith.constant 0.000000e+00 : f32
      %81 = vector.shape_cast %80 : vector<64x1xi1> to vector<64x1xi1>
      %82 = vector.broadcast %81 : vector<64x1xi1> to vector<64x128xi1>
      %83 = vector.broadcast %cst_53 : f32 to vector<64x128xf32>
      %84 = arith.select %82, %75, %83 : vector<64x128xi1>, vector<64x128xf32>
      %85 = arith.addf %62, %84 : vector<64x128xf32>
      %c3 = arith.constant 3 : index
      %c0_54 = arith.constant 0 : index
      %c0_55 = arith.constant 0 : index
      %86 = vector.load %arg4[%c3, %c0_54, %c0_55] : memref<4x128x128xbf16, #tpu.memory_space<vmem>>, vector<1x128x128xbf16>
      %87 = vector.shape_cast %86 : vector<1x128x128xbf16> to vector<128x128xbf16>
      %cst_56 = arith.constant dense<0.000000e+00> : vector<64x128xf32>
      %88 = tpu.matmul %14, %87, %cst_56 {dimension_numbers = #tpu.dot_dimension_numbers<[1], [0], [0], [1], [0, 0, 1, 1], [], []>} : vector<64x128xbf16>, vector<128x128xbf16>, vector<64x128xf32> -> vector<64x128xf32>
      %c3_57 = arith.constant 3 : index
      %c0_58 = arith.constant 0 : index
      %c0_59 = arith.constant 0 : index
      %89 = vector.load %arg5[%c3_57, %c0_58, %c0_59] : memref<4x1x128xf32, #tpu.memory_space<vmem>>, vector<1x1x128xf32>
      %90 = vector.shape_cast %89 : vector<1x1x128xf32> to vector<1x128xf32>
      %91 = vector.broadcast %90 : vector<1x128xf32> to vector<64x128xf32>
      %92 = arith.addf %88, %91 : vector<64x128xf32>
      %cst_60 = arith.constant 0.000000e+00 : f32
      %93 = vector.broadcast %cst_60 : f32 to vector<64x128xf32>
      %94 = arith.maximumf %92, %93 : vector<64x128xf32>
      %95 = arith.truncf %94 : vector<64x128xf32> to vector<64x128xbf16>
      %c3_61 = arith.constant 3 : index
      %c0_62 = arith.constant 0 : index
      %c0_63 = arith.constant 0 : index
      %96 = vector.load %arg6[%c3_61, %c0_62, %c0_63] : memref<4x128x128xbf16, #tpu.memory_space<vmem>>, vector<1x128x128xbf16>
      %97 = vector.shape_cast %96 : vector<1x128x128xbf16> to vector<128x128xbf16>
      %cst_64 = arith.constant dense<0.000000e+00> : vector<64x128xf32>
      %98 = tpu.matmul %95, %97, %cst_64 {dimension_numbers = #tpu.dot_dimension_numbers<[1], [0], [0], [1], [0, 0, 1, 1], [], []>} : vector<64x128xbf16>, vector<128x128xbf16>, vector<64x128xf32> -> vector<64x128xf32>
      %c14_i32_65 = arith.constant 14 : i32
      %99 = vector.broadcast %c14_i32_65 : i32 to vector<64x1xi32>
      %100 = arith.cmpi sge, %15, %99 : vector<64x1xi32>
      %c50_i32 = arith.constant 50 : i32
      %101 = vector.broadcast %c50_i32 : i32 to vector<64x1xi32>
      %102 = arith.cmpi slt, %15, %101 : vector<64x1xi32>
      %103 = arith.andi %100, %102 : vector<64x1xi1>
      %cst_66 = arith.constant 0.000000e+00 : f32
      %104 = vector.shape_cast %103 : vector<64x1xi1> to vector<64x1xi1>
      %105 = vector.broadcast %104 : vector<64x1xi1> to vector<64x128xi1>
      %106 = vector.broadcast %cst_66 : f32 to vector<64x128xf32>
      %107 = arith.select %105, %98, %106 : vector<64x128xi1>, vector<64x128xf32>
      %108 = arith.addf %85, %107 : vector<64x128xf32>
      %109 = arith.truncf %108 : vector<64x128xf32> to vector<64x128xbf16>
      %c0_67 = arith.constant 0 : index
      %c0_68 = arith.constant 0 : index
      %c0_69 = arith.constant 0 : index
      %110 = vector.load %arg7[%c0_67, %c0_68, %c0_69] : memref<1x64x128xbf16, #tpu.memory_space<vmem>>, vector<1x64x128xbf16>
      %111 = vector.shape_cast %110 : vector<1x64x128xbf16> to vector<64x128xbf16>
      %112 = vector.shape_cast %109 : vector<64x128xbf16> to vector<1x64x128xbf16>
      tpu.vector_store %arg7[%c0_67, %c0_68, %c0_69], %112 {strides = array<i32>} : memref<1x64x128xbf16, #tpu.memory_space<vmem>>, vector<1x64x128xbf16>,
    } else {
    }
    return
  }
  func.func @transform_0(%arg0: i32, %arg1: i32) -> (i32, i32, i32) {
    %c0_i32 = arith.constant 0 : i32
    %c0_i32_0 = arith.constant 0 : i32
    return %arg0, %arg1, %c0_i32 : i32, i32, i32
  }
  func.func @transform_1(%arg0: i32, %arg1: i32) -> (i32, i32) {
    %c0_i32 = arith.constant 0 : i32
    %c0_i32_0 = arith.constant 0 : i32
    return %c0_i32, %arg1 : i32, i32
  }
  func.func @transform_2(%arg0: i32, %arg1: i32) -> (i32, i32, i32) {
    %c0_i32 = arith.constant 0 : i32
    %c0_i32_0 = arith.constant 0 : i32
    %c0_i32_1 = arith.constant 0 : i32
    %c0_i32_2 = arith.constant 0 : i32
    return %c0_i32, %c0_i32_0, %c0_i32_1 : i32, i32, i32
  }
  func.func @transform_3(%arg0: i32, %arg1: i32) -> (i32, i32, i32) {
    %c0_i32 = arith.constant 0 : i32
    %c0_i32_0 = arith.constant 0 : i32
    %c0_i32_1 = arith.constant 0 : i32
    %c0_i32_2 = arith.constant 0 : i32
    return %c0_i32, %c0_i32_0, %c0_i32_1 : i32, i32, i32
  }
  func.func @transform_4(%arg0: i32, %arg1: i32) -> (i32, i32, i32) {
    %c0_i32 = arith.constant 0 : i32
    %c0_i32_0 = arith.constant 0 : i32
    %c0_i32_1 = arith.constant 0 : i32
    %c0_i32_2 = arith.constant 0 : i32
    return %c0_i32, %c0_i32_0, %c0_i32_1 : i32, i32, i32
  }
  func.func @transform_5(%arg0: i32, %arg1: i32) -> (i32, i32, i32) {
    %c0_i32 = arith.constant 0 : i32
    %c0_i32_0 = arith.constant 0 : i32
    %c0_i32_1 = arith.constant 0 : i32
    return %arg0, %c0_i32, %c0_i32_0 : i32, i32, i32
  }
}

</mosaic_0001>

<llo_original>
// kernel: tpu_custom_call.1
$region0: #{tpu_custom_call.1}
  #allocation0 [shape = 'u32[]', space=smem, size = 0x4, offset = 0x4, fixed_abs, tag = 'smem constant byte address 0x4 - core index']
  #allocation1 [shape = 'u32[144,128]{1,0:T(1,128)}', space=vmem, size = 0x12000, scoped, tag = 'internal scratch']
  #allocation2 [shape = 'f32[64,128]{1,0:T(8,128)}', space=vmem, size = 0x8000, scoped, tag = 'scratch operand']
  %s0 = inlined_call_operand.hbm [shape: bf16[2,256,128], index: 0, kind: input, shape index: {}]
  %s1 = inlined_call_operand.hbm [shape: bf16[64,256], index: 1, kind: input, shape index: {}]
  %s2 = inlined_call_operand.hbm [shape: bf16[4,128,128], index: 2, kind: input, shape index: {}]
  %s3 = inlined_call_operand.vmem [shape: f32[4,1,128], index: 3, kind: input, shape index: {}]
  %s4 = inlined_call_operand.hbm [shape: bf16[4,128,128], index: 4, kind: input, shape index: {}]
  %s5 = inlined_call_operand.hbm [shape: bf16[2,64,128], index: 5, kind: output, shape index: {}]
  %s6 = sld [smem:[#allocation0]]
  $region77: #{tpu_custom_call.1} parent=0
    _
  %s8 = ssub.s32 1, %s6
  %s9 = scalar_select 0, %s8, %s6
  $region1: #{tpu_custom_call.1} parent=0
    #allocation3 [shape = 'u8[131072]{0}', space=vmem, size = 0x20000, scoped, tag = 'input window, operand 0']
    #allocation4 [shape = 's32[2]{0}', space=sflag, size = 0x8, scoped, tag = 'scoped memory for tpu_custom_call.1']
    #allocation5 [shape = 's32[2]{0}', space=sflag, size = 0x8, scoped, tag = 'scoped memory for tpu_custom_call.1']
    #allocation6 [shape = 'u8[32768]{0}', space=vmem, size = 0x8000, scoped, tag = 'input window, operand 1, single buffered']
    #allocation7 [shape = 's32[1]{0}', space=sflag, size = 0x4, scoped, tag = 'scoped memory for tpu_custom_call.1']
    #allocation8 [shape = 'u8[131072]{0}', space=vmem, size = 0x20000, scoped, tag = 'input window, operand 2, single buffered']
    #allocation9 [shape = 'u8[131072]{0}', space=vmem, size = 0x20000, scoped, tag = 'input window, operand 4, single buffered']
    #allocation10 [shape = 's32[1]{0}', space=sflag, size = 0x4, scoped, tag = 'scoped memory for tpu_custom_call.1']
    #allocation11 [shape = 'u8[32768]{0}', space=vmem, size = 0x8000, scoped, tag = 'output window, operand 0']
    %10 = vsyncpa [#allocation4], 0
    %s11 = scalar_lea.sflag [#allocation4], 1
    %12 = vsyncpa %s11, 0
    %13 = vsyncpa [#allocation7], 0
    %14 = vsyncpa [#allocation10], 0
    %15 = vsyncpa [#allocation5], 0
    %s16 = scalar_lea.sflag [#allocation5], 1
    %17 = vsyncpa %s16, 0
    loop: start=0, step=1, limit=4
    $region2: #{tpu_custom_call.1} parent=1 // loop_pre_header
      _
    $region3: #{tpu_custom_call.1} parent=1 // loop_header
      %s19 = sphi 0, %s23
      %p20 = scmp.ge.s32.totalorder %s19, 4
      %s26 = sphi 0, %s38
      %s27 = sphi 0, %s34
      %s28 = sphi 0, %s26
      %s29 = sphi 0, %s27
      %s30 = sphi 0, %s28
      %s31 = sphi 0, %s29
      %s43 = sphi 0, %s45
      %s46 = sphi 0, %s43
      %s47 = sphi 0, %s46
      %s63 = sphi 0, %s47
      %s69 = sphi 0, %s71
      %s72 = sphi 0, %s69
      %s73 = sphi 0, %s72
      %s89 = sphi 0, %s73
      %s93 = sphi 0, %s93
      %s95 = sphi 0, %s93
      %s96 = sphi 0, %s95
      %s110 = sphi 0, %s96
      %s114 = sphi 0, %s114
      %s116 = sphi 0, %s114
      %s117 = sphi 0, %s116
      %s131 = sphi 0, %s117
      %s135 = sphi 0, %s135
      %s137 = sphi 0, %s135
      %s138 = sphi 0, %s137
      %s152 = sphi 0, %s138
      %s158 = sphi 0, %s160
      %s161 = sphi 0, %s158
      %s162 = sphi 0, %s161
      %s178 = sphi 0, %s162
    $region4: #{tpu_custom_call.1} parent=1 // loop_header_branch
      %22 = sbr.rel (%p20) target = $region8
    $region5: #{tpu_custom_call.1} parent=1 // loop_body
      %s24 = ssub.s32 %s19, 1
      %s25 = ssub.s32 %s19, 2
      %s32 = sadd.s32 1, %s27
      %p33 = scmp.ge.s32.totalorder %s32, 1
      %s34 = scalar_select %p33, 0, %s32
      %s35 = sadd.s32 1, %s26
      %s36 = scalar_select %p33, %s35, %s26
      %p37 = scmp.ge.s32.totalorder %s36, 2
      %s38 = scalar_select %p37, 0, %s36
      %s39 = ssub.s32 %s26, %s38
      %s40 = ssub.s32 %s27, %s34
      %s41 = sor.u32 %s39, %s40
      %p42 = scmp.eq.s32.totalorder %s41, 0
      %s44 = sadd.s32 %s43, 1
      %s45 = scalar_select %p42, %s43, %s44
      %p48 = pneg %p42
      %p49 = scmp.eq.s32.totalorder %s19, 1
      %p50 = por %p48, %p49
      %p51 = scmp.ne.s32.totalorder %s43, %s46
      %p52 = scmp.eq.s32.totalorder %s19, 0
      %p53 = por %p51, %p52
      %p54 = scmp.ne.s32.totalorder %s43, %s46
      %p55 = scmp.eq.s32.totalorder %s24, 1
      %p56 = por %p54, %p55
      %p57 = scmp.ne.s32.totalorder %s46, %s47
      %p58 = scmp.eq.s32.totalorder %s24, 0
      %p59 = por %p57, %p58
      %p60 = scmp.ne.s32.totalorder %s46, %s47
      %p61 = scmp.eq.s32.totalorder %s25, 1
      %p62 = por %p60, %p61
      %p64 = scmp.ne.s32.totalorder %s47, %s63
      %p65 = scmp.eq.s32.totalorder %s25, 0
      %p66 = por %p64, %p65
      %s67 = ssub.s32 %s27, %s34
      %p68 = scmp.eq.s32.totalorder %s67, 0
      %s70 = sadd.s32 %s69, 1
      %s71 = scalar_select %p68, %s69, %s70
      %p74 = pneg %p68
      %p75 = scmp.eq.s32.totalorder %s19, 1
      %p76 = por %p74, %p75
      %p77 = scmp.ne.s32.totalorder %s69, %s72
      %p78 = scmp.eq.s32.totalorder %s19, 0
      %p79 = por %p77, %p78
      %p80 = scmp.ne.s32.totalorder %s69, %s72
      %p81 = scmp.eq.s32.totalorder %s24, 1
      %p82 = por %p80, %p81
      %p83 = scmp.ne.s32.totalorder %s72, %s73
      %p84 = scmp.eq.s32.totalorder %s24, 0
      %p85 = por %p83, %p84
      %p86 = scmp.ne.s32.totalorder %s72, %s73
      %p87 = scmp.eq.s32.totalorder %s25, 1
      %p88 = por %p86, %p87
      %p90 = scmp.ne.s32.totalorder %s73, %s89
      %p91 = scmp.eq.s32.totalorder %s25, 0
      %p92 = por %p90, %p91
      %s94 = sadd.s32 %s93, 1
      %p97 = scmp.eq.s32.totalorder %s19, 1
      %p98 = scmp.ne.s32.totalorder %s93, %s95
      %p99 = scmp.eq.s32.totalorder %s19, 0
      %p100 = por %p98, %p99
      %p101 = scmp.ne.s32.totalorder %s93, %s95
      %p102 = scmp.eq.s32.totalorder %s24, 1
      %p103 = por %p101, %p102
      %p104 = scmp.ne.s32.totalorder %s95, %s96
      %p105 = scmp.eq.s32.totalorder %s24, 0
      %p106 = por %p104, %p105
      %p107 = scmp.ne.s32.totalorder %s95, %s96
      %p108 = scmp.eq.s32.totalorder %s25, 1
      %p109 = por %p107, %p108
      %p111 = scmp.ne.s32.totalorder %s96, %s110
      %p112 = scmp.eq.s32.totalorder %s25, 0
      %p113 = por %p111, %p112
      %s115 = sadd.s32 %s114, 1
      %p118 = scmp.eq.s32.totalorder %s19, 1
      %p119 = scmp.ne.s32.totalorder %s114, %s116
      %p120 = scmp.eq.s32.totalorder %s19, 0
      %p121 = por %p119, %p120
      %p122 = scmp.ne.s32.totalorder %s114, %s116
      %p123 = scmp.eq.s32.totalorder %s24, 1
      %p124 = por %p122, %p123
      %p125 = scmp.ne.s32.totalorder %s116, %s117
      %p126 = scmp.eq.s32.totalorder %s24, 0
      %p127 = por %p125, %p126
      %p128 = scmp.ne.s32.totalorder %s116, %s117
      %p129 = scmp.eq.s32.totalorder %s25, 1
      %p130 = por %p128, %p129
      %p132 = scmp.ne.s32.totalorder %s117, %s131
      %p133 = scmp.eq.s32.totalorder %s25, 0
      %p134 = por %p132, %p133
      %s136 = sadd.s32 %s135, 1
      %p139 = scmp.eq.s32.totalorder %s19, 1
      %p140 = scmp.ne.s32.totalorder %s135, %s137
      %p141 = scmp.eq.s32.totalorder %s19, 0
      %p142 = por %p140, %p141
      %p143 = scmp.ne.s32.totalorder %s135, %s137
      %p144 = scmp.eq.s32.totalorder %s24, 1
      %p145 = por %p143, %p144
      %p146 = scmp.ne.s32.totalorder %s137, %s138
      %p147 = scmp.eq.s32.totalorder %s24, 0
      %p148 = por %p146, %p147
      %p149 = scmp.ne.s32.totalorder %s137, %s138
      %p150 = scmp.eq.s32.totalorder %s25, 1
      %p151 = por %p149, %p150
      %p153 = scmp.ne.s32.totalorder %s138, %s152
      %p154 = scmp.eq.s32.totalorder %s25, 0
      %p155 = por %p153, %p154
      %s156 = ssub.s32 %s26, %s38
      %p157 = scmp.eq.s32.totalorder %s156, 0
      %s159 = sadd.s32 %s158, 1
      %s160 = scalar_select %p157, %s158, %s159
      %p163 = pneg %p157
      %p164 = scmp.eq.s32.totalorder %s19, 1
      %p165 = por %p163, %p164
      %p166 = scmp.ne.s32.totalorder %s158, %s161
      %p167 = scmp.eq.s32.totalorder %s19, 0
      %p168 = por %p166, %p167
      %p169 = scmp.ne.s32.totalorder %s158, %s161
      %p170 = scmp.eq.s32.totalorder %s24, 1
      %p171 = por %p169, %p170
      %p172 = scmp.ne.s32.totalorder %s161, %s162
      %p173 = scmp.eq.s32.totalorder %s24, 0
      %p174 = por %p172, %p173
      %p175 = scmp.ne.s32.totalorder %s161, %s162
      %p176 = scmp.eq.s32.totalorder %s25, 1
      %p177 = por %p175, %p176
      %p179 = scmp.ne.s32.totalorder %s162, %s178
      %p180 = scmp.eq.s32.totalorder %s25, 0
      %p181 = por %p179, %p180
      %p182 = scmp.le.s32.totalorder 1, %s19
      %p183 = scmp.lt.s32.totalorder %s19, 3
      %p184 = pnand %p182, %p183
      %p185 = pneg %p184
      // Predicated region
      $region9: #{tpu_custom_call.1} parent=5 // pred_check
        _
      $region10: #{tpu_custom_call.1} parent=5 // pred_check_branch
        %187 = sbr.rel (%p184) target = $region12
      $region11: #{tpu_custom_call.1} parent=5 // pred_region
        %s188 = ssub.s32 %s19, 1
        // Predicated region
        $region13: #{tpu_custom_call.1} parent=11 // pred_check
          %p189 = pneg %p85
        $region14: #{tpu_custom_call.1} parent=11 // pred_check_branch
          %191 = sbr.rel (%p189) target = $region16
        $region15: #{tpu_custom_call.1} parent=11 // pred_region
          %s192 = smul.u32 2, %s29
          %s194 = ssub.s32 1024, 1024
          %195 = vsyncadd [#allocation7], %s194
          %s196 = smul.addr %s192, 64
          %s197 = scalar_lea.hbm %s1, %s196
          %s198 = sshll.u32 [#allocation6], 4
          %s199 = int_to_ptr.vmem [resolvable:$true] %s198
          %204 = dma.hbm_to_vmem [thread:$0]  %s197, 1024, %s199, [#allocation7], 128, 128, 8
        $region16: #{tpu_custom_call.1} parent=11 // pred_fallthru
          _
        // Predicated region
        $region17: #{tpu_custom_call.1} parent=11 // pred_check
          %p205 = pneg %p106
        $region18: #{tpu_custom_call.1} parent=11 // pred_check_branch
          %207 = sbr.rel (%p205) target = $region20
        $region19: #{tpu_custom_call.1} parent=11 // pred_region
          %s209 = ssub.s32 4096, 4096
          %210 = vsyncadd [#allocation7], %s209
          %s211 = sshll.u32 [#allocation8], 4
          %s212 = int_to_ptr.vmem [resolvable:$true] %s211
          %217 = dma.hbm_to_vmem [thread:$0]  %s2, 4096, %s212, [#allocation7], 64, 64, 4
        $region20: #{tpu_custom_call.1} parent=11 // pred_fallthru
          _
        // Predicated region
        $region21: #{tpu_custom_call.1} parent=11 // pred_check
          %p218 = pneg %p127
        $region22: #{tpu_custom_call.1} parent=11 // pred_check_branch
          %220 = sbr.rel (%p218) target = $region24
        $region23: #{tpu_custom_call.1} parent=11 // pred_region
          _
        $region24: #{tpu_custom_call.1} parent=11 // pred_fallthru
          _
        // Predicated region
        $region25: #{tpu_custom_call.1} parent=11 // pred_check
          %p221 = pneg %p148
        $region26: #{tpu_custom_call.1} parent=11 // pred_check_branch
          %223 = sbr.rel (%p221) target = $region28
        $region27: #{tpu_custom_call.1} parent=11 // pred_region
          %s225 = ssub.s32 4096, 4096
          %226 = vsyncadd [#allocation10], %s225
          %s227 = sshll.u32 [#allocation9], 4
          %s228 = int_to_ptr.vmem [resolvable:$true] %s227
          %233 = dma.hbm_to_vmem [thread:$0]  %s4, 4096, %s228, [#allocation10], 64, 64, 4
        $region28: #{tpu_custom_call.1} parent=11 // pred_fallthru
          _
      $region12: #{tpu_custom_call.1} parent=5 // pred_fallthru
        _
      %p234 = scmp.lt.s32.totalorder %s19, 2
      // Predicated region
      $region29: #{tpu_custom_call.1} parent=5 // pred_check
        %p235 = pneg %p234
      $region30: #{tpu_custom_call.1} parent=5 // pred_check_branch
        %237 = sbr.rel (%p235) target = $region32
      $region31: #{tpu_custom_call.1} parent=5 // pred_region
        // Predicated region
        $region33: #{tpu_custom_call.1} parent=31 // pred_check
          %p238 = pneg %p53
        $region34: #{tpu_custom_call.1} parent=31 // pred_check_branch
          %240 = sbr.rel (%p238) target = $region36
        $region35: #{tpu_custom_call.1} parent=31 // pred_region
          %s241 = sand.u32 %s43, 1
          %s242 = scalar_lea.sflag [#allocation4], %s241
          %s243 = sand.u32 %s43, 1
          %s244 = smul.addr %s243, 128
          %s245 = scalar_lea.vmem [#allocation3], %s244
          %s246 = smul.u32 32, %s27
          %s248 = ssub.s32 2048, 2048
          %249 = vsyncadd %s242, %s248
          %s250 = smul.addr %s26, 32
          %s251 = sadd.s32 %s246, %s250
          %s252 = smul.addr %s251, 64
          %s253 = scalar_lea.hbm %s0, %s252
          %s254 = sshll.u32 %s245, 4
          %s255 = int_to_ptr.vmem [resolvable:$true] %s254
          %260 = dma.hbm_to_vmem [thread:$0]  %s253, 2048, %s255, %s242, 64, 64, 4
        $region36: #{tpu_custom_call.1} parent=31 // pred_fallthru
          _
      $region32: #{tpu_custom_call.1} parent=5 // pred_fallthru
        _
      %p261 = scmp.le.s32.totalorder 1, %s19
      %p262 = scmp.lt.s32.totalorder %s19, 3
      %p263 = pnand %p261, %p262
      %p264 = pneg %p263
      // Predicated region
      $region37: #{tpu_custom_call.1} parent=5 // pred_check
        _
      $region38: #{tpu_custom_call.1} parent=5 // pred_check_branch
        %266 = sbr.rel (%p263) target = $region40
      $region39: #{tpu_custom_call.1} parent=5 // pred_region
        %s267 = ssub.s32 %s19, 1
        %s268 = sand.u32 %s46, 1
        %s269 = scalar_lea.sflag [#allocation4], %s268
        %s270 = sand.u32 %s46, 1
        %s271 = smul.addr %s270, 128
        %s272 = scalar_lea.vmem [#allocation3], %s271
        // Predicated region
        $region41: #{tpu_custom_call.1} parent=39 // pred_check
          %p273 = pneg %p59
        $region42: #{tpu_custom_call.1} parent=39 // pred_check_branch
          %275 = sbr.rel (%p273) target = $region44
        $region43: #{tpu_custom_call.1} parent=39 // pred_region
          %276 = dma.done %s269, 2048
        $region44: #{tpu_custom_call.1} parent=39 // pred_fallthru
          _
        // Predicated region
        $region45: #{tpu_custom_call.1} parent=39 // pred_check
          %p277 = pneg %p85
        $region46: #{tpu_custom_call.1} parent=39 // pred_check_branch
          %279 = sbr.rel (%p277) target = $region48
        $region47: #{tpu_custom_call.1} parent=39 // pred_region
          %280 = dma.done [#allocation7], 1024
        $region48: #{tpu_custom_call.1} parent=39 // pred_fallthru
          _
        // Predicated region
        $region49: #{tpu_custom_call.1} parent=39 // pred_check
          %p281 = pneg %p106
        $region50: #{tpu_custom_call.1} parent=39 // pred_check_branch
          %283 = sbr.rel (%p281) target = $region52
        $region51: #{tpu_custom_call.1} parent=39 // pred_region
          %284 = dma.done [#allocation7], 4096
        $region52: #{tpu_custom_call.1} parent=39 // pred_fallthru
          _
        // Predicated region
        $region53: #{tpu_custom_call.1} parent=39 // pred_check
          %p285 = pneg %p148
        $region54: #{tpu_custom_call.1} parent=39 // pred_check_branch
          %287 = sbr.rel (%p285) target = $region56
        $region55: #{tpu_custom_call.1} parent=39 // pred_region
          %288 = dma.done [#allocation10], 4096
        $region56: #{tpu_custom_call.1} parent=39 // pred_fallthru
          _
        %s289 = sand.u32 %s46, 1
        %s290 = scalar_lea.sflag [#allocation4], %s289
        %s291 = sand.u32 %s46, 1
        %s292 = smul.addr %s291, 128
        %s293 = scalar_lea.vmem [#allocation3], %s292
        %p294 = pneg %p59
        %p295 = pneg %p56
        %p296 = pneg %p85
        %p297 = pneg %p82
        %p298 = pneg %p106
        %p299 = pneg %p103
        %p300 = pneg %p127
        %p301 = pneg %p124
        %p302 = pneg %p148
        %p303 = pneg %p145
        %p304 = pneg %p174
        %p305 = pneg %p171
        %s306 = sand.u32 %s161, 1
        %s307 = scalar_lea.sflag [#allocation5], %s306
        %s308 = sand.u32 %s161, 1
        %s309 = smul.addr %s308, 32
        %s310 = scalar_lea.vmem [#allocation11], %s309
        %s311 = smul.u32 32, %s29
        %s312 = smul.u32 2, %s29
        %p314 = scmp.eq.s32.totalorder %s29, 0
        // Predicated region
        $region57: #{tpu_custom_call.1} parent=39 // pred_check
          %p315 = pneg %p314
        $region58: #{tpu_custom_call.1} parent=39 // pred_check_branch
          %317 = sbr.rel (%p315) target = $region60
        $region59: #{tpu_custom_call.1} parent=39 // pred_region
          %318 = vst [vmem:[#allocation2] sm:$0xff] 0.0
          %319 = vst [vmem:[#allocation2 + $0x8] sm:$0xff] 0.0
          %320 = vst [vmem:[#allocation2 + $0x10] sm:$0xff] 0.0
          %321 = vst [vmem:[#allocation2 + $0x18] sm:$0xff] 0.0
          %322 = vst [vmem:[#allocation2 + $0x20] sm:$0xff] 0.0
          %323 = vst [vmem:[#allocation2 + $0x28] sm:$0xff] 0.0
          %324 = vst [vmem:[#allocation2 + $0x30] sm:$0xff] 0.0
          %325 = vst [vmem:[#allocation2 + $0x38] sm:$0xff] 0.0
        $region60: #{tpu_custom_call.1} parent=39 // pred_fallthru
          _
        %v326 = vld [vmem:[#allocation2] sm:$0xff]
        %v327 = vld [vmem:[#allocation2 + $0x8] sm:$0xff]
        %v328 = vld [vmem:[#allocation2 + $0x10] sm:$0xff]
        %v329 = vld [vmem:[#allocation2 + $0x18] sm:$0xff]
        %v330 = vld [vmem:[#allocation2 + $0x20] sm:$0xff]
        %v331 = vld [vmem:[#allocation2 + $0x28] sm:$0xff]
        %v332 = vld [vmem:[#allocation2 + $0x30] sm:$0xff]
        %v333 = vld [vmem:[#allocation2 + $0x38] sm:$0xff]
        %v334 = vld [vmem:[#allocation6] sm:$0xff]
        %v335 = vld [vmem:[#allocation6 + $0x8] sm:$0xff]
        %v336 = vld [vmem:[#allocation6 + $0x10] sm:$0xff]
        %v337 = vld [vmem:[#allocation6 + $0x18] sm:$0xff]
        %v338 = vld [vmem:[#allocation6 + $0x20] sm:$0xff]
        %v339 = vld [vmem:[#allocation6 + $0x28] sm:$0xff]
        %v340 = vld [vmem:[#allocation6 + $0x30] sm:$0xff]
        %v341 = vld [vmem:[#allocation6 + $0x38] sm:$0xff]
        %v342 = vld [vmem:[%s272] sm:$0xf]
        %v343 = vld [vmem:[%s272 + $0x4] sm:$0xf]
        %v344 = vld [vmem:[%s272 + $0x8] sm:$0xf]
        %v345 = vld [vmem:[%s272 + $0xc] sm:$0xf]
        %v346 = vld [vmem:[%s272 + $0x10] sm:$0xf]
        %v347 = vld [vmem:[%s272 + $0x14] sm:$0xf]
        %v348 = vld [vmem:[%s272 + $0x18] sm:$0xf]
        %v349 = vld [vmem:[%s272 + $0x1c] sm:$0xf]
        %v350 = vld [vmem:[%s272 + $0x20] sm:$0xf]
        %v351 = vld [vmem:[%s272 + $0x24] sm:$0xf]
        %v352 = vld [vmem:[%s272 + $0x28] sm:$0xf]
        %v353 = vld [vmem:[%s272 + $0x2c] sm:$0xf]
        %v354 = vld [vmem:[%s272 + $0x30] sm:$0xf]
        %v355 = vld [vmem:[%s272 + $0x34] sm:$0xf]
        %v356 = vld [vmem:[%s272 + $0x38] sm:$0xf]
        %v357 = vld [vmem:[%s272 + $0x3c] sm:$0xf]
        %v358 = vld [vmem:[%s272 + $0x40] sm:$0xf]
        %v359 = vld [vmem:[%s272 + $0x44] sm:$0xf]
        %v360 = vld [vmem:[%s272 + $0x48] sm:$0xf]
        %v361 = vld [vmem:[%s272 + $0x4c] sm:$0xf]
        %v362 = vld [vmem:[%s272 + $0x50] sm:$0xf]
        %v363 = vld [vmem:[%s272 + $0x54] sm:$0xf]
        %v364 = vld [vmem:[%s272 + $0x58] sm:$0xf]
        %v365 = vld [vmem:[%s272 + $0x5c] sm:$0xf]
        %v366 = vld [vmem:[%s272 + $0x60] sm:$0xf]
        %v367 = vld [vmem:[%s272 + $0x64] sm:$0xf]
        %v368 = vld [vmem:[%s272 + $0x68] sm:$0xf]
        %v369 = vld [vmem:[%s272 + $0x6c] sm:$0xf]
        %v370 = vld [vmem:[%s272 + $0x70] sm:$0xf]
        %v371 = vld [vmem:[%s272 + $0x74] sm:$0xf]
        %v372 = vld [vmem:[%s272 + $0x78] sm:$0xf]
        %v373 = vld [vmem:[%s272 + $0x7c] sm:$0xf]
        %v382 = vunpack.c.l.b16 %v334
        %v383 = vunpack.c.h.b16 %v334
        %v384 = vunpack.c.l.b16 %v335
        %v385 = vunpack.c.h.b16 %v335
        %v386 = vunpack.c.l.b16 %v336
        %v387 = vunpack.c.h.b16 %v336
        %v388 = vunpack.c.l.b16 %v337
        %v389 = vunpack.c.h.b16 %v337
        %v390 = vunpack.c.l.b16 %v338
        %v391 = vunpack.c.h.b16 %v338
        %v392 = vunpack.c.l.b16 %v339
        %v393 = vunpack.c.h.b16 %v339
        %v394 = vunpack.c.l.b16 %v340
        %v395 = vunpack.c.h.b16 %v340
        %v396 = vunpack.c.l.b16 %v341
        %v397 = vunpack.c.h.b16 %v341
        %v398 = vpack.c.b16 %v384, %v382
        %v399 = vpack.c.b16 %v385, %v383
        %v400 = vpack.c.b16 %v388, %v386
        %v401 = vpack.c.b16 %v389, %v387
        %v402 = vpack.c.b16 %v392, %v390
        %v403 = vpack.c.b16 %v393, %v391
        %v404 = vpack.c.b16 %v396, %v394
        %v405 = vpack.c.b16 %v397, %v395
        %v446 = vunpack.c.l.b16 %v342
        %v447 = vunpack.c.l.b16 %v343
        %v448 = vunpack.c.l.b16 %v344
        %v449 = vunpack.c.l.b16 %v345
        %v450 = vunpack.c.l.b16 %v346
        %v451 = vunpack.c.l.b16 %v347
        %v452 = vunpack.c.l.b16 %v348
        %v453 = vunpack.c.l.b16 %v349
        %v454 = vunpack.c.l.b16 %v350
        %v455 = vunpack.c.l.b16 %v351
        %v456 = vunpack.c.l.b16 %v352
        %v457 = vunpack.c.l.b16 %v353
        %v458 = vunpack.c.l.b16 %v354
        %v459 = vunpack.c.l.b16 %v355
        %v460 = vunpack.c.l.b16 %v356
        %v461 = vunpack.c.l.b16 %v357
        %v462 = vunpack.c.l.b16 %v358
        %v463 = vunpack.c.l.b16 %v359
        %v464 = vunpack.c.l.b16 %v360
        %v465 = vunpack.c.l.b16 %v361
        %v466 = vunpack.c.l.b16 %v362
        %v467 = vunpack.c.l.b16 %v363
        %v468 = vunpack.c.l.b16 %v364
        %v469 = vunpack.c.l.b16 %v365
        %v470 = vunpack.c.l.b16 %v366
        %v471 = vunpack.c.l.b16 %v367
        %v472 = vunpack.c.l.b16 %v368
        %v473 = vunpack.c.l.b16 %v369
        %v474 = vunpack.c.l.b16 %v370
        %v475 = vunpack.c.l.b16 %v371
        %v476 = vunpack.c.l.b16 %v372
        %v477 = vunpack.c.l.b16 %v373
        %v478 = vpack.c.b16 %v447, %v446
        %v479 = vpack.c.b16 %v449, %v448
        %v480 = vpack.c.b16 %v451, %v450
        %v481 = vpack.c.b16 %v453, %v452
        %v482 = vpack.c.b16 %v455, %v454
        %v483 = vpack.c.b16 %v457, %v456
        %v484 = vpack.c.b16 %v459, %v458
        %v485 = vpack.c.b16 %v461, %v460
        %v486 = vpack.c.b16 %v463, %v462
        %v487 = vpack.c.b16 %v465, %v464
        %v488 = vpack.c.b16 %v467, %v466
        %v489 = vpack.c.b16 %v469, %v468
        %v490 = vpack.c.b16 %v471, %v470
        %v491 = vpack.c.b16 %v473, %v472
        %v492 = vpack.c.b16 %v475, %v474
        %v493 = vpack.c.b16 %v477, %v476
        %510 = vmatprep.subr.bf16.mxu0 0
        %511 = vmatpush1.bf16.msra.mxu0 %v478
        %512 = vmatprep.subr.bf16.mxu0 0
        %513 = vmatpush1.bf16.msra.mxu0 %v479
        %514 = vmatprep.subr.bf16.mxu0 0
        %515 = vmatpush1.bf16.msra.mxu0 %v480
        %516 = vmatprep.subr.bf16.mxu0 0
        %517 = vmatpush1.bf16.msra.mxu0 %v481
        %518 = vmatprep.subr.bf16.mxu0 0
        %519 = vmatpush1.bf16.msra.mxu0 %v482
        %520 = vmatprep.subr.bf16.mxu0 0
        %521 = vmatpush1.bf16.msra.mxu0 %v483
        %522 = vmatprep.subr.bf16.mxu0 0
        %523 = vmatpush1.bf16.msra.mxu0 %v484
        %524 = vmatprep.subr.bf16.mxu0 0
        %525 = vmatpush1.bf16.msra.mxu0 %v485
        %526 = vmatprep.subr.bf16.mxu0 0
        %527 = vmatpush1.bf16.msra.mxu0 %v486
        %528 = vmatprep.subr.bf16.mxu0 0
        %529 = vmatpush1.bf16.msra.mxu0 %v487
        %530 = vmatprep.subr.bf16.mxu0 0
        %531 = vmatpush1.bf16.msra.mxu0 %v488
        %532 = vmatprep.subr.bf16.mxu0 0
        %533 = vmatpush1.bf16.msra.mxu0 %v489
        %534 = vmatprep.subr.bf16.mxu0 0
        %535 = vmatpush1.bf16.msra.mxu0 %v490
        %536 = vmatprep.subr.bf16.mxu0 0
        %537 = vmatpush1.bf16.msra.mxu0 %v491
        %538 = vmatprep.subr.bf16.mxu0 0
        %539 = vmatpush1.bf16.msra.mxu0 %v492
        %540 = vmatprep.subr.bf16.mxu0 0
        %541 = vmatpush1.bf16.msra.mxu0 %v493
        %542 = vmatprep.mubr.bf16.mxu0 %v399
        %543 = vmatmul.mubr.bf16.gmra.mrb[0].mxu0 %v398
        %v544 = vpop.f32.mrb[0].mxu0
        %v545 = vadd.f32 0.0, %v544
        %v546 = vpop.f32.mrb[0].mxu0
        %v547 = vpop.f32.mrb[0].mxu0
        %v548 = vadd.f32 0.0, %v547
        %v549 = vpop.f32.mrb[0].mxu0
        %550 = vmatprep.mubr.bf16.mxu0 %v401
        %551 = vmatmul.mubr.bf16.gmra.mrb[0].mxu0 %v400
        %v552 = vpop.f32.mrb[0].mxu0
        %v553 = vadd.f32 0.0, %v552
        %v554 = vpop.f32.mrb[0].mxu0
        %v555 = vpop.f32.mrb[0].mxu0
        %v556 = vadd.f32 0.0, %v555
        %v557 = vpop.f32.mrb[0].mxu0
        %558 = vmatprep.mubr.bf16.mxu0 %v403
        %559 = vmatmul.mubr.bf16.gmra.mrb[0].mxu0 %v402
        %v560 = vpop.f32.mrb[0].mxu0
        %v561 = vadd.f32 0.0, %v560
        %v562 = vpop.f32.mrb[0].mxu0
        %v563 = vpop.f32.mrb[0].mxu0
        %v564 = vadd.f32 0.0, %v563
        %v565 = vpop.f32.mrb[0].mxu0
        %566 = vmatprep.mubr.bf16.mxu0 %v405
        %567 = vmatmul.mubr.bf16.gmra.mrb[0].mxu0 %v404
        %v568 = vpop.f32.mrb[0].mxu0
        %v569 = vadd.f32 0.0, %v568
        %v570 = vpop.f32.mrb[0].mxu0
        %v571 = vpop.f32.mrb[0].mxu0
        %v572 = vadd.f32 0.0, %v571
        %v573 = vpop.f32.mrb[0].mxu0
        %574 = vdwg.mxu0
        %v575 = vadd.f32 %v326, %v545
        %v576 = vadd.f32 %v327, %v548
        %v577 = vadd.f32 %v328, %v553
        %v578 = vadd.f32 %v329, %v556
        %v579 = vadd.f32 %v330, %v561
        %v580 = vadd.f32 %v331, %v564
        %v581 = vadd.f32 %v332, %v569
        %v582 = vadd.f32 %v333, %v572
        %583 = vst [vmem:[#allocation2] sm:$0xff] %v575
        %584 = vst [vmem:[#allocation2 + $0x8] sm:$0xff] %v576
        %585 = vst [vmem:[#allocation2 + $0x10] sm:$0xff] %v577
        %586 = vst [vmem:[#allocation2 + $0x18] sm:$0xff] %v578
        %587 = vst [vmem:[#allocation2 + $0x20] sm:$0xff] %v579
        %588 = vst [vmem:[#allocation2 + $0x28] sm:$0xff] %v580
        %589 = vst [vmem:[#allocation2 + $0x30] sm:$0xff] %v581
        %590 = vst [vmem:[#allocation2 + $0x38] sm:$0xff] %v582
        // Predicated region
        $region61: #{tpu_custom_call.1} parent=39 // pred_check
          %p591 = pneg %p314
        $region62: #{tpu_custom_call.1} parent=39 // pred_check_branch
          %593 = sbr.rel (%p591) target = $region64
        $region63: #{tpu_custom_call.1} parent=39 // pred_region
          %v594 = vld [vmem:[#allocation2] sm:$0xff]
          %v595 = vld [vmem:[#allocation2 + $0x8] sm:$0xff]
          %v596 = vld [vmem:[#allocation2 + $0x10] sm:$0xff]
          %v597 = vld [vmem:[#allocation2 + $0x18] sm:$0xff]
          %v598 = vld [vmem:[#allocation2 + $0x20] sm:$0xff]
          %v599 = vld [vmem:[#allocation2 + $0x28] sm:$0xff]
          %v600 = vld [vmem:[#allocation2 + $0x30] sm:$0xff]
          %v601 = vld [vmem:[#allocation2 + $0x38] sm:$0xff]
          %v602 = vpack.c.bf16 %v595, %v594
          %v603 = vpack.c.bf16 %v597, %v596
          %v604 = vpack.c.bf16 %v599, %v598
          %v605 = vpack.c.bf16 %v601, %v600
          %v606 = vlaneseq
          %v607 = vshrl.u32 %v606, 7
          %v608 = vadd.s32 %v607, 8
          %v609 = vadd.s32 %v607, 16
          %v610 = vadd.s32 %v607, 24
          %v611 = vadd.s32 %v607, 32
          %v612 = vadd.s32 %v607, 40
          %v613 = vadd.s32 %v607, 48
          %v614 = vadd.s32 %v607, 56
          %v615 = vld [vmem:[#allocation8] sm:$0xf]
          %v616 = vld [vmem:[#allocation8 + $0x4] sm:$0xf]
          %v617 = vld [vmem:[#allocation8 + $0x8] sm:$0xf]
          %v618 = vld [vmem:[#allocation8 + $0xc] sm:$0xf]
          %v619 = vld [vmem:[#allocation8 + $0x10] sm:$0xf]
          %v620 = vld [vmem:[#allocation8 + $0x14] sm:$0xf]
          %v621 = vld [vmem:[#allocation8 + $0x18] sm:$0xf]
          %v622 = vld [vmem:[#allocation8 + $0x1c] sm:$0xf]
          %v623 = vld [vmem:[#allocation8 + $0x20] sm:$0xf]
          %v624 = vld [vmem:[#allocation8 + $0x24] sm:$0xf]
          %v625 = vld [vmem:[#allocation8 + $0x28] sm:$0xf]
          %v626 = vld [vmem:[#allocation8 + $0x2c] sm:$0xf]
          %v627 = vld [vmem:[#allocation8 + $0x30] sm:$0xf]
          %v628 = vld [vmem:[#allocation8 + $0x34] sm:$0xf]
          %v629 = vld [vmem:[#allocation8 + $0x38] sm:$0xf]
          %v630 = vld [vmem:[#allocation8 + $0x3c] sm:$0xf]
          %v631 = vld [vmem:[%s3] sm:$0x1]
          %v633 = vlaneseq
          %v634 = vshrl.u32 %v633, 7
          %v635 = vsub.s32 0, %v634
          %v636 = vrot.slane %v631, %v635
          %v654 = vunpack.c.l.b16 %v615
          %v655 = vunpack.c.l.b16 %v616
          %v656 = vunpack.c.l.b16 %v617
          %v657 = vunpack.c.l.b16 %v618
          %v658 = vunpack.c.l.b16 %v619
          %v659 = vunpack.c.l.b16 %v620
          %v660 = vunpack.c.l.b16 %v621
          %v661 = vunpack.c.l.b16 %v622
          %v662 = vunpack.c.l.b16 %v623
          %v663 = vunpack.c.l.b16 %v624
          %v664 = vunpack.c.l.b16 %v625
          %v665 = vunpack.c.l.b16 %v626
          %v666 = vunpack.c.l.b16 %v627
          %v667 = vunpack.c.l.b16 %v628
          %v668 = vunpack.c.l.b16 %v629
          %v669 = vunpack.c.l.b16 %v630
          %v670 = vpack.c.b16 %v655, %v654
          %v671 = vpack.c.b16 %v657, %v656
          %v672 = vpack.c.b16 %v659, %v658
          %v673 = vpack.c.b16 %v661, %v660
          %v674 = vpack.c.b16 %v663, %v662
          %v675 = vpack.c.b16 %v665, %v664
          %v676 = vpack.c.b16 %v667, %v666
          %v677 = vpack.c.b16 %v669, %v668
          %686 = vmatprep.subr.bf16.mxu0 0
          %687 = vmatpush1.bf16.msra.mxu0 %v670
          %688 = vmatprep.subr.bf16.mxu0 0
          %689 = vmatpush1.bf16.msra.mxu0 %v671
          %690 = vmatprep.subr.bf16.mxu0 0
          %691 = vmatpush1.bf16.msra.mxu0 %v672
          %692 = vmatprep.subr.bf16.mxu0 0
          %693 = vmatpush1.bf16.msra.mxu0 %v673
          %694 = vmatprep.subr.bf16.mxu0 0
          %695 = vmatpush1.bf16.msra.mxu0 %v674
          %696 = vmatprep.subr.bf16.mxu0 0
          %697 = vmatpush1.bf16.msra.mxu0 %v675
          %698 = vmatprep.subr.bf16.mxu0 0
          %699 = vmatpush1.bf16.msra.mxu0 %v676
          %700 = vmatprep.subr.bf16.mxu0 0
          %701 = vmatpush1.bf16.msra.mxu0 %v677
          %702 = vmatprep.subr.bf16.mxu0 0
          %703 = vmatpush1.bf16.msra.mxu0 0
          %704 = vmatprep.subr.bf16.mxu0 0
          %705 = vmatpush1.bf16.msra.mxu0 0
          %706 = vmatprep.subr.bf16.mxu0 0
          %707 = vmatpush1.bf16.msra.mxu0 0
          %708 = vmatprep.subr.bf16.mxu0 0
          %709 = vmatpush1.bf16.msra.mxu0 0
          %710 = vmatprep.subr.bf16.mxu0 0
          %711 = vmatpush1.bf16.msra.mxu0 0
          %712 = vmatprep.subr.bf16.mxu0 0
          %713 = vmatpush1.bf16.msra.mxu0 0
          %714 = vmatprep.subr.bf16.mxu0 0
          %715 = vmatpush1.bf16.msra.mxu0 0
          %716 = vmatprep.subr.bf16.mxu0 0
          %717 = vmatpush1.bf16.msra.mxu0 0
          %718 = vmatprep.mubr.bf16.mxu0 0
          %719 = vmatmul.mubr.bf16.gmra.mrb[0].mxu0 %v602
          %v720 = vpop.f32.mrb[0].mxu0
          %v721 = vadd.f32 %v636, %v720
          %v722 = vpop.f32.mrb[0].mxu0
          %v723 = vpop.f32.mrb[0].mxu0
          %v724 = vadd.f32 %v636, %v723
          %v725 = vpop.f32.mrb[0].mxu0
          %726 = vmatprep.mubr.bf16.mxu0 0
          %727 = vmatmul.mubr.bf16.gmra.mrb[0].mxu0 %v603
          %v728 = vpop.f32.mrb[0].mxu0
          %v729 = vadd.f32 %v636, %v728
          %v730 = vpop.f32.mrb[0].mxu0
          %v731 = vpop.f32.mrb[0].mxu0
          %v732 = vadd.f32 %v636, %v731
          %v733 = vpop.f32.mrb[0].mxu0
          %734 = vmatprep.mubr.bf16.mxu0 0
          %735 = vmatmul.mubr.bf16.gmra.mrb[0].mxu0 %v604
          %v736 = vpop.f32.mrb[0].mxu0
          %v737 = vadd.f32 %v636, %v736
          %v738 = vpop.f32.mrb[0].mxu0
          %v739 = vpop.f32.mrb[0].mxu0
          %v740 = vadd.f32 %v636, %v739
          %v741 = vpop.f32.mrb[0].mxu0
          %742 = vmatprep.mubr.bf16.mxu0 0
          %743 = vmatmul.mubr.bf16.gmra.mrb[0].mxu0 %v605
          %v744 = vpop.f32.mrb[0].mxu0
          %v745 = vadd.f32 %v636, %v744
          %v746 = vpop.f32.mrb[0].mxu0
          %v747 = vpop.f32.mrb[0].mxu0
          %v748 = vadd.f32 %v636, %v747
          %v749 = vpop.f32.mrb[0].mxu0
          %750 = vdwg.mxu0
          %v751 = vmax.f32 %v721, 0.0
          %v752 = vmax.f32 %v724, 0.0
          %v753 = vmax.f32 %v729, 0.0
          %v754 = vmax.f32 %v732, 0.0
          %v755 = vmax.f32 %v737, 0.0
          %v756 = vmax.f32 %v740, 0.0
          %v757 = vmax.f32 %v745, 0.0
          %v758 = vmax.f32 %v748, 0.0
          %v759 = vpack.c.bf16 %v752, %v751
          %v760 = vpack.c.bf16 %v754, %v753
          %v761 = vpack.c.bf16 %v756, %v755
          %v762 = vpack.c.bf16 %v758, %v757
          %v763 = vld [vmem:[#allocation9] sm:$0xf]
          %v764 = vld [vmem:[#allocation9 + $0x4] sm:$0xf]
          %v765 = vld [vmem:[#allocation9 + $0x8] sm:$0xf]
          %v766 = vld [vmem:[#allocation9 + $0xc] sm:$0xf]
          %v767 = vld [vmem:[#allocation9 + $0x10] sm:$0xf]
          %v768 = vld [vmem:[#allocation9 + $0x14] sm:$0xf]
          %v769 = vld [vmem:[#allocation9 + $0x18] sm:$0xf]
          %v770 = vld [vmem:[#allocation9 + $0x1c] sm:$0xf]
          %v771 = vld [vmem:[#allocation9 + $0x20] sm:$0xf]
          %v772 = vld [vmem:[#allocation9 + $0x24] sm:$0xf]
          %v773 = vld [vmem:[#allocation9 + $0x28] sm:$0xf]
          %v774 = vld [vmem:[#allocation9 + $0x2c] sm:$0xf]
          %v775 = vld [vmem:[#allocation9 + $0x30] sm:$0xf]
          %v776 = vld [vmem:[#allocation9 + $0x34] sm:$0xf]
          %v777 = vld [vmem:[#allocation9 + $0x38] sm:$0xf]
          %v778 = vld [vmem:[#allocation9 + $0x3c] sm:$0xf]
          %v795 = vunpack.c.l.b16 %v763
          %v796 = vunpack.c.l.b16 %v764
          %v797 = vunpack.c.l.b16 %v765
          %v798 = vunpack.c.l.b16 %v766
          %v799 = vunpack.c.l.b16 %v767
          %v800 = vunpack.c.l.b16 %v768
          %v801 = vunpack.c.l.b16 %v769
          %v802 = vunpack.c.l.b16 %v770
          %v803 = vunpack.c.l.b16 %v771
          %v804 = vunpack.c.l.b16 %v772
          %v805 = vunpack.c.l.b16 %v773
          %v806 = vunpack.c.l.b16 %v774
          %v807 = vunpack.c.l.b16 %v775
          %v808 = vunpack.c.l.b16 %v776
          %v809 = vunpack.c.l.b16 %v777
          %v810 = vunpack.c.l.b16 %v778
          %v811 = vpack.c.b16 %v796, %v795
          %v812 = vpack.c.b16 %v798, %v797
          %v813 = vpack.c.b16 %v800, %v799
          %v814 = vpack.c.b16 %v802, %v801
          %v815 = vpack.c.b16 %v804, %v803
          %v816 = vpack.c.b16 %v806, %v805
          %v817 = vpack.c.b16 %v808, %v807
          %v818 = vpack.c.b16 %v810, %v809
          %827 = vmatprep.subr.bf16.mxu0 0
          %828 = vmatpush1.bf16.msra.mxu0 %v811
          %829 = vmatprep.subr.bf16.mxu0 0
          %830 = vmatpush1.bf16.msra.mxu0 %v812
          %831 = vmatprep.subr.bf16.mxu0 0
          %832 = vmatpush1.bf16.msra.mxu0 %v813
          %833 = vmatprep.subr.bf16.mxu0 0
          %834 = vmatpush1.bf16.msra.mxu0 %v814
          %835 = vmatprep.subr.bf16.mxu0 0
          %836 = vmatpush1.bf16.msra.mxu0 %v815
          %837 = vmatprep.subr.bf16.mxu0 0
          %838 = vmatpush1.bf16.msra.mxu0 %v816
          %839 = vmatprep.subr.bf16.mxu0 0
          %840 = vmatpush1.bf16.msra.mxu0 %v817
          %841 = vmatprep.subr.bf16.mxu0 0
          %842 = vmatpush1.bf16.msra.mxu0 %v818
          %843 = vmatprep.subr.bf16.mxu0 0
          %844 = vmatpush1.bf16.msra.mxu0 0
          %845 = vmatprep.subr.bf16.mxu0 0
          %846 = vmatpush1.bf16.msra.mxu0 0
          %847 = vmatprep.subr.bf16.mxu0 0
          %848 = vmatpush1.bf16.msra.mxu0 0
          %849 = vmatprep.subr.bf16.mxu0 0
          %850 = vmatpush1.bf16.msra.mxu0 0
          %851 = vmatprep.subr.bf16.mxu0 0
          %852 = vmatpush1.bf16.msra.mxu0 0
          %853 = vmatprep.subr.bf16.mxu0 0
          %854 = vmatpush1.bf16.msra.mxu0 0
          %855 = vmatprep.subr.bf16.mxu0 0
          %856 = vmatpush1.bf16.msra.mxu0 0
          %857 = vmatprep.subr.bf16.mxu0 0
          %858 = vmatpush1.bf16.msra.mxu0 0
          %859 = vmatprep.mubr.bf16.mxu0 0
          %860 = vmatmul.mubr.bf16.gmra.mrb[0].mxu0 %v759
          %v861 = vpop.f32.mrb[0].mxu0
          %v862 = vadd.f32 0.0, %v861
          %v863 = vpop.f32.mrb[0].mxu0
          %v864 = vpop.f32.mrb[0].mxu0
          %v865 = vadd.f32 0.0, %v864
          %v866 = vpop.f32.mrb[0].mxu0
          %867 = vmatprep.mubr.bf16.mxu0 0
          %868 = vmatmul.mubr.bf16.gmra.mrb[0].mxu0 %v760
          %v869 = vpop.f32.mrb[0].mxu0
          %v870 = vadd.f32 0.0, %v869
          %v871 = vpop.f32.mrb[0].mxu0
          %v872 = vpop.f32.mrb[0].mxu0
          %v873 = vadd.f32 0.0, %v872
          %v874 = vpop.f32.mrb[0].mxu0
          %875 = vmatprep.mubr.bf16.mxu0 0
          %876 = vmatmul.mubr.bf16.gmra.mrb[0].mxu0 %v761
          %v877 = vpop.f32.mrb[0].mxu0
          %v878 = vadd.f32 0.0, %v877
          %v879 = vpop.f32.mrb[0].mxu0
          %v880 = vpop.f32.mrb[0].mxu0
          %v881 = vadd.f32 0.0, %v880
          %v882 = vpop.f32.mrb[0].mxu0
          %883 = vmatprep.mubr.bf16.mxu0 0
          %884 = vmatmul.mubr.bf16.gmra.mrb[0].mxu0 %v762
          %v885 = vpop.f32.mrb[0].mxu0
          %v886 = vadd.f32 0.0, %v885
          %v887 = vpop.f32.mrb[0].mxu0
          %v888 = vpop.f32.mrb[0].mxu0
          %v889 = vadd.f32 0.0, %v888
          %v890 = vpop.f32.mrb[0].mxu0
          %891 = vdwg.mxu0
          %vm892 = vcmp.ge.s32.totalorder %v607, 0
          %vm893 = vcmp.ge.s32.totalorder %v608, 0
          %vm894 = vcmp.ge.s32.totalorder %v609, 0
          %vm895 = vcmp.ge.s32.totalorder %v610, 0
          %vm896 = vcmp.ge.s32.totalorder %v611, 0
          %vm897 = vcmp.ge.s32.totalorder %v612, 0
          %vm898 = vcmp.ge.s32.totalorder %v613, 0
          %vm899 = vcmp.ge.s32.totalorder %v614, 0
          %vm900 = vcmp.lt.s32.totalorder %v607, 1
          %vm901 = vcmp.lt.s32.totalorder %v608, 1
          %vm902 = vcmp.lt.s32.totalorder %v609, 1
          %vm903 = vcmp.lt.s32.totalorder %v610, 1
          %vm904 = vcmp.lt.s32.totalorder %v611, 1
          %vm905 = vcmp.lt.s32.totalorder %v612, 1
          %vm906 = vcmp.lt.s32.totalorder %v613, 1
          %vm907 = vcmp.lt.s32.totalorder %v614, 1
          %vm908 = vmand %vm892, %vm900
          %vm909 = vmand %vm893, %vm901
          %vm910 = vmand %vm894, %vm902
          %vm911 = vmand %vm895, %vm903
          %vm912 = vmand %vm896, %vm904
          %vm913 = vmand %vm897, %vm905
          %vm914 = vmand %vm898, %vm906
          %vm915 = vmand %vm899, %vm907
          %v916 = vsel %vm908, 1, 0
          %v917 = vsel %vm909, 1, 0
          %v918 = vsel %vm910, 1, 0
          %v919 = vsel %vm911, 1, 0
          %v920 = vsel %vm912, 1, 0
          %v921 = vsel %vm913, 1, 0
          %v922 = vsel %vm914, 1, 0
          %v923 = vsel %vm915, 1, 0
          %vm924 = vcmp.eq.s32.totalorder %v916, 1
          %vm925 = vcmp.eq.s32.totalorder %v917, 1
          %vm926 = vcmp.eq.s32.totalorder %v918, 1
          %vm927 = vcmp.eq.s32.totalorder %v919, 1
          %vm928 = vcmp.eq.s32.totalorder %v920, 1
          %vm929 = vcmp.eq.s32.totalorder %v921, 1
          %vm930 = vcmp.eq.s32.totalorder %v922, 1
          %vm931 = vcmp.eq.s32.totalorder %v923, 1
          %v932 = vsel %vm924, %v862, 0.0
          %v933 = vsel %vm925, %v865, 0.0
          %v934 = vsel %vm926, %v870, 0.0
          %v935 = vsel %vm927, %v873, 0.0
          %v936 = vsel %vm928, %v878, 0.0
          %v937 = vsel %vm929, %v881, 0.0
          %v938 = vsel %vm930, %v886, 0.0
          %v939 = vsel %vm931, %v889, 0.0
          %v940 = vadd.f32 %v932, 0.0
          %v941 = vadd.f32 %v933, 0.0
          %v942 = vadd.f32 %v934, 0.0
          %v943 = vadd.f32 %v935, 0.0
          %v944 = vadd.f32 %v936, 0.0
          %v945 = vadd.f32 %v937, 0.0
          %v946 = vadd.f32 %v938, 0.0
          %v947 = vadd.f32 %v939, 0.0
          %s948 = scalar_lea.vmem [#allocation8], 64
          %v949 = vld [vmem:[%s948] sm:$0xf]
          %v950 = vld [vmem:[%s948 + $0x4] sm:$0xf]
          %v951 = vld [vmem:[%s948 + $0x8] sm:$0xf]
          %v952 = vld [vmem:[%s948 + $0xc] sm:$0xf]
          %v953 = vld [vmem:[%s948 + $0x10] sm:$0xf]
          %v954 = vld [vmem:[%s948 + $0x14] sm:$0xf]
          %v955 = vld [vmem:[%s948 + $0x18] sm:$0xf]
          %v956 = vld [vmem:[%s948 + $0x1c] sm:$0xf]
          %v957 = vld [vmem:[%s948 + $0x20] sm:$0xf]
          %v958 = vld [vmem:[%s948 + $0x24] sm:$0xf]
          %v959 = vld [vmem:[%s948 + $0x28] sm:$0xf]
          %v960 = vld [vmem:[%s948 + $0x2c] sm:$0xf]
          %v961 = vld [vmem:[%s948 + $0x30] sm:$0xf]
          %v962 = vld [vmem:[%s948 + $0x34] sm:$0xf]
          %v963 = vld [vmem:[%s948 + $0x38] sm:$0xf]
          %v964 = vld [vmem:[%s948 + $0x3c] sm:$0xf]
          %s965 = scalar_lea.vmem %s3, 1
          %v966 = vld [vmem:[%s965] sm:$0x1]
          %v968 = vlaneseq
          %v969 = vshrl.u32 %v968, 7
          %v970 = vsub.s32 0, %v969
          %v971 = vrot.slane %v966, %v970
          %v989 = vunpack.c.l.b16 %v949
          %v990 = vunpack.c.l.b16 %v950
          %v991 = vunpack.c.l.b16 %v951
          %v992 = vunpack.c.l.b16 %v952
          %v993 = vunpack.c.l.b16 %v953
          %v994 = vunpack.c.l.b16 %v954
          %v995 = vunpack.c.l.b16 %v955
          %v996 = vunpack.c.l.b16 %v956
          %v997 = vunpack.c.l.b16 %v957
          %v998 = vunpack.c.l.b16 %v958
          %v999 = vunpack.c.l.b16 %v959
          %v1000 = vunpack.c.l.b16 %v960
          %v1001 = vunpack.c.l.b16 %v961
          %v1002 = vunpack.c.l.b16 %v962
          %v1003 = vunpack.c.l.b16 %v963
          %v1004 = vunpack.c.l.b16 %v964
          %v1005 = vpack.c.b16 %v990, %v989
          %v1006 = vpack.c.b16 %v992, %v991
          %v1007 = vpack.c.b16 %v994, %v993
          %v1008 = vpack.c.b16 %v996, %v995
          %v1009 = vpack.c.b16 %v998, %v997
          %v1010 = vpack.c.b16 %v1000, %v999
          %v1011 = vpack.c.b16 %v1002, %v1001
          %v1012 = vpack.c.b16 %v1004, %v1003
          %1021 = vmatprep.subr.bf16.mxu0 0
          %1022 = vmatpush1.bf16.msra.mxu0 %v1005
          %1023 = vmatprep.subr.bf16.mxu0 0
          %1024 = vmatpush1.bf16.msra.mxu0 %v1006
          %1025 = vmatprep.subr.bf16.mxu0 0
          %1026 = vmatpush1.bf16.msra.mxu0 %v1007
          %1027 = vmatprep.subr.bf16.mxu0 0
          %1028 = vmatpush1.bf16.msra.mxu0 %v1008
          %1029 = vmatprep.subr.bf16.mxu0 0
          %1030 = vmatpush1.bf16.msra.mxu0 %v1009
          %1031 = vmatprep.subr.bf16.mxu0 0
          %1032 = vmatpush1.bf16.msra.mxu0 %v1010
          %1033 = vmatprep.subr.bf16.mxu0 0
          %1034 = vmatpush1.bf16.msra.mxu0 %v1011
          %1035 = vmatprep.subr.bf16.mxu0 0
          %1036 = vmatpush1.bf16.msra.mxu0 %v1012
          %1037 = vmatprep.subr.bf16.mxu0 0
          %1038 = vmatpush1.bf16.msra.mxu0 0
          %1039 = vmatprep.subr.bf16.mxu0 0
          %1040 = vmatpush1.bf16.msra.mxu0 0
          %1041 = vmatprep.subr.bf16.mxu0 0
          %1042 = vmatpush1.bf16.msra.mxu0 0
          %1043 = vmatprep.subr.bf16.mxu0 0
          %1044 = vmatpush1.bf16.msra.mxu0 0
          %1045 = vmatprep.subr.bf16.mxu0 0
          %1046 = vmatpush1.bf16.msra.mxu0 0
          %1047 = vmatprep.subr.bf16.mxu0 0
          %1048 = vmatpush1.bf16.msra.mxu0 0
          %1049 = vmatprep.subr.bf16.mxu0 0
          %1050 = vmatpush1.bf16.msra.mxu0 0
          %1051 = vmatprep.subr.bf16.mxu0 0
          %1052 = vmatpush1.bf16.msra.mxu0 0
          %1053 = vmatprep.mubr.bf16.mxu0 0
          %1054 = vmatmul.mubr.bf16.gmra.mrb[0].mxu0 %v602
          %v1055 = vpop.f32.mrb[0].mxu0
          %v1056 = vadd.f32 %v971, %v1055
          %v1057 = vpop.f32.mrb[0].mxu0
          %v1058 = vpop.f32.mrb[0].mxu0
          %v1059 = vadd.f32 %v971, %v1058
          %v1060 = vpop.f32.mrb[0].mxu0
          %1061 = vmatprep.mubr.bf16.mxu0 0
          %1062 = vmatmul.mubr.bf16.gmra.mrb[0].mxu0 %v603
          %v1063 = vpop.f32.mrb[0].mxu0
          %v1064 = vadd.f32 %v971, %v1063
          %v1065 = vpop.f32.mrb[0].mxu0
          %v1066 = vpop.f32.mrb[0].mxu0
          %v1067 = vadd.f32 %v971, %v1066
          %v1068 = vpop.f32.mrb[0].mxu0
          %1069 = vmatprep.mubr.bf16.mxu0 0
          %1070 = vmatmul.mubr.bf16.gmra.mrb[0].mxu0 %v604
          %v1071 = vpop.f32.mrb[0].mxu0
          %v1072 = vadd.f32 %v971, %v1071
          %v1073 = vpop.f32.mrb[0].mxu0
          %v1074 = vpop.f32.mrb[0].mxu0
          %v1075 = vadd.f32 %v971, %v1074
          %v1076 = vpop.f32.mrb[0].mxu0
          %1077 = vmatprep.mubr.bf16.mxu0 0
          %1078 = vmatmul.mubr.bf16.gmra.mrb[0].mxu0 %v605
          %v1079 = vpop.f32.mrb[0].mxu0
          %v1080 = vadd.f32 %v971, %v1079
          %v1081 = vpop.f32.mrb[0].mxu0
          %v1082 = vpop.f32.mrb[0].mxu0
          %v1083 = vadd.f32 %v971, %v1082
          %v1084 = vpop.f32.mrb[0].mxu0
          %1085 = vdwg.mxu0
          %v1086 = vmax.f32 %v1056, 0.0
          %v1087 = vmax.f32 %v1059, 0.0
          %v1088 = vmax.f32 %v1064, 0.0
          %v1089 = vmax.f32 %v1067, 0.0
          %v1090 = vmax.f32 %v1072, 0.0
          %v1091 = vmax.f32 %v1075, 0.0
          %v1092 = vmax.f32 %v1080, 0.0
          %v1093 = vmax.f32 %v1083, 0.0
          %v1094 = vpack.c.bf16 %v1087, %v1086
          %v1095 = vpack.c.bf16 %v1089, %v1088
          %v1096 = vpack.c.bf16 %v1091, %v1090
          %v1097 = vpack.c.bf16 %v1093, %v1092
          %s1098 = scalar_lea.vmem [#allocation9], 64
          %v1099 = vld [vmem:[%s1098] sm:$0xf]
          %v1100 = vld [vmem:[%s1098 + $0x4] sm:$0xf]
          %v1101 = vld [vmem:[%s1098 + $0x8] sm:$0xf]
          %v1102 = vld [vmem:[%s1098 + $0xc] sm:$0xf]
          %v1103 = vld [vmem:[%s1098 + $0x10] sm:$0xf]
          %v1104 = vld [vmem:[%s1098 + $0x14] sm:$0xf]
          %v1105 = vld [vmem:[%s1098 + $0x18] sm:$0xf]
          %v1106 = vld [vmem:[%s1098 + $0x1c] sm:$0xf]
          %v1107 = vld [vmem:[%s1098 + $0x20] sm:$0xf]
          %v1108 = vld [vmem:[%s1098 + $0x24] sm:$0xf]
          %v1109 = vld [vmem:[%s1098 + $0x28] sm:$0xf]
          %v1110 = vld [vmem:[%s1098 + $0x2c] sm:$0xf]
          %v1111 = vld [vmem:[%s1098 + $0x30] sm:$0xf]
          %v1112 = vld [vmem:[%s1098 + $0x34] sm:$0xf]
          %v1113 = vld [vmem:[%s1098 + $0x38] sm:$0xf]
          %v1114 = vld [vmem:[%s1098 + $0x3c] sm:$0xf]
          %v1131 = vunpack.c.l.b16 %v1099
          %v1132 = vunpack.c.l.b16 %v1100
          %v1133 = vunpack.c.l.b16 %v1101
          %v1134 = vunpack.c.l.b16 %v1102
          %v1135 = vunpack.c.l.b16 %v1103
          %v1136 = vunpack.c.l.b16 %v1104
          %v1137 = vunpack.c.l.b16 %v1105
          %v1138 = vunpack.c.l.b16 %v1106
          %v1139 = vunpack.c.l.b16 %v1107
          %v1140 = vunpack.c.l.b16 %v1108
          %v1141 = vunpack.c.l.b16 %v1109
          %v1142 = vunpack.c.l.b16 %v1110
          %v1143 = vunpack.c.l.b16 %v1111
          %v1144 = vunpack.c.l.b16 %v1112
          %v1145 = vunpack.c.l.b16 %v1113
          %v1146 = vunpack.c.l.b16 %v1114
          %v1147 = vpack.c.b16 %v1132, %v1131
          %v1148 = vpack.c.b16 %v1134, %v1133
          %v1149 = vpack.c.b16 %v1136, %v1135
          %v1150 = vpack.c.b16 %v1138, %v1137
          %v1151 = vpack.c.b16 %v1140, %v1139
          %v1152 = vpack.c.b16 %v1142, %v1141
          %v1153 = vpack.c.b16 %v1144, %v1143
          %v1154 = vpack.c.b16 %v1146, %v1145
          %1163 = vmatprep.subr.bf16.mxu0 0
          %1164 = vmatpush1.bf16.msra.mxu0 %v1147
          %1165 = vmatprep.subr.bf16.mxu0 0
          %1166 = vmatpush1.bf16.msra.mxu0 %v1148
          %1167 = vmatprep.subr.bf16.mxu0 0
          %1168 = vmatpush1.bf16.msra.mxu0 %v1149
          %1169 = vmatprep.subr.bf16.mxu0 0
          %1170 = vmatpush1.bf16.msra.mxu0 %v1150
          %1171 = vmatprep.subr.bf16.mxu0 0
          %1172 = vmatpush1.bf16.msra.mxu0 %v1151
          %1173 = vmatprep.subr.bf16.mxu0 0
          %1174 = vmatpush1.bf16.msra.mxu0 %v1152
          %1175 = vmatprep.subr.bf16.mxu0 0
          %1176 = vmatpush1.bf16.msra.mxu0 %v1153
          %1177 = vmatprep.subr.bf16.mxu0 0
          %1178 = vmatpush1.bf16.msra.mxu0 %v1154
          %1179 = vmatprep.subr.bf16.mxu0 0
          %1180 = vmatpush1.bf16.msra.mxu0 0
          %1181 = vmatprep.subr.bf16.mxu0 0
          %1182 = vmatpush1.bf16.msra.mxu0 0
          %1183 = vmatprep.subr.bf16.mxu0 0
          %1184 = vmatpush1.bf16.msra.mxu0 0
          %1185 = vmatprep.subr.bf16.mxu0 0
          %1186 = vmatpush1.bf16.msra.mxu0 0
          %1187 = vmatprep.subr.bf16.mxu0 0
          %1188 = vmatpush1.bf16.msra.mxu0 0
          %1189 = vmatprep.subr.bf16.mxu0 0
          %1190 = vmatpush1.bf16.msra.mxu0 0
          %1191 = vmatprep.subr.bf16.mxu0 0
          %1192 = vmatpush1.bf16.msra.mxu0 0
          %1193 = vmatprep.subr.bf16.mxu0 0
          %1194 = vmatpush1.bf16.msra.mxu0 0
          %1195 = vmatprep.mubr.bf16.mxu0 0
          %1196 = vmatmul.mubr.bf16.gmra.mrb[0].mxu0 %v1094
          %v1197 = vpop.f32.mrb[0].mxu0
          %v1198 = vadd.f32 0.0, %v1197
          %v1199 = vpop.f32.mrb[0].mxu0
          %v1200 = vpop.f32.mrb[0].mxu0
          %v1201 = vadd.f32 0.0, %v1200
          %v1202 = vpop.f32.mrb[0].mxu0
          %1203 = vmatprep.mubr.bf16.mxu0 0
          %1204 = vmatmul.mubr.bf16.gmra.mrb[0].mxu0 %v1095
          %v1205 = vpop.f32.mrb[0].mxu0
          %v1206 = vadd.f32 0.0, %v1205
          %v1207 = vpop.f32.mrb[0].mxu0
          %v1208 = vpop.f32.mrb[0].mxu0
          %v1209 = vadd.f32 0.0, %v1208
          %v1210 = vpop.f32.mrb[0].mxu0
          %1211 = vmatprep.mubr.bf16.mxu0 0
          %1212 = vmatmul.mubr.bf16.gmra.mrb[0].mxu0 %v1096
          %v1213 = vpop.f32.mrb[0].mxu0
          %v1214 = vadd.f32 0.0, %v1213
          %v1215 = vpop.f32.mrb[0].mxu0
          %v1216 = vpop.f32.mrb[0].mxu0
          %v1217 = vadd.f32 0.0, %v1216
          %v1218 = vpop.f32.mrb[0].mxu0
          %1219 = vmatprep.mubr.bf16.mxu0 0
          %1220 = vmatmul.mubr.bf16.gmra.mrb[0].mxu0 %v1097
          %v1221 = vpop.f32.mrb[0].mxu0
          %v1222 = vadd.f32 0.0, %v1221
          %v1223 = vpop.f32.mrb[0].mxu0
          %v1224 = vpop.f32.mrb[0].mxu0
          %v1225 = vadd.f32 0.0, %v1224
          %v1226 = vpop.f32.mrb[0].mxu0
          %1227 = vdwg.mxu0
          %vm1228 = vcmp.ge.s32.totalorder %v607, 1
          %vm1229 = vcmp.ge.s32.totalorder %v608, 1
          %vm1230 = vcmp.ge.s32.totalorder %v609, 1
          %vm1231 = vcmp.ge.s32.totalorder %v610, 1
          %vm1232 = vcmp.ge.s32.totalorder %v611, 1
          %vm1233 = vcmp.ge.s32.totalorder %v612, 1
          %vm1234 = vcmp.ge.s32.totalorder %v613, 1
          %vm1235 = vcmp.ge.s32.totalorder %v614, 1
          %vm1236 = vcmp.lt.s32.totalorder %v607, 5
          %vm1237 = vcmp.lt.s32.totalorder %v608, 5
          %vm1238 = vcmp.lt.s32.totalorder %v609, 5
          %vm1239 = vcmp.lt.s32.totalorder %v610, 5
          %vm1240 = vcmp.lt.s32.totalorder %v611, 5
          %vm1241 = vcmp.lt.s32.totalorder %v612, 5
          %vm1242 = vcmp.lt.s32.totalorder %v613, 5
          %vm1243 = vcmp.lt.s32.totalorder %v614, 5
          %vm1244 = vmand %vm1228, %vm1236
          %vm1245 = vmand %vm1229, %vm1237
          %vm1246 = vmand %vm1230, %vm1238
          %vm1247 = vmand %vm1231, %vm1239
          %vm1248 = vmand %vm1232, %vm1240
          %vm1249 = vmand %vm1233, %vm1241
          %vm1250 = vmand %vm1234, %vm1242
          %vm1251 = vmand %vm1235, %vm1243
          %v1252 = vsel %vm1244, 1, 0
          %v1253 = vsel %vm1245, 1, 0
          %v1254 = vsel %vm1246, 1, 0
          %v1255 = vsel %vm1247, 1, 0
          %v1256 = vsel %vm1248, 1, 0
          %v1257 = vsel %vm1249, 1, 0
          %v1258 = vsel %vm1250, 1, 0
          %v1259 = vsel %vm1251, 1, 0
          %vm1260 = vcmp.eq.s32.totalorder %v1252, 1
          %vm1261 = vcmp.eq.s32.totalorder %v1253, 1
          %vm1262 = vcmp.eq.s32.totalorder %v1254, 1
          %vm1263 = vcmp.eq.s32.totalorder %v1255, 1
          %vm1264 = vcmp.eq.s32.totalorder %v1256, 1
          %vm1265 = vcmp.eq.s32.totalorder %v1257, 1
          %vm1266 = vcmp.eq.s32.totalorder %v1258, 1
          %vm1267 = vcmp.eq.s32.totalorder %v1259, 1
          %v1268 = vsel %vm1260, %v1198, 0.0
          %v1269 = vsel %vm1261, %v1201, 0.0
          %v1270 = vsel %vm1262, %v1206, 0.0
          %v1271 = vsel %vm1263, %v1209, 0.0
          %v1272 = vsel %vm1264, %v1214, 0.0
          %v1273 = vsel %vm1265, %v1217, 0.0
          %v1274 = vsel %vm1266, %v1222, 0.0
          %v1275 = vsel %vm1267, %v1225, 0.0
          %v1276 = vadd.f32 %v940, %v1268
          %v1277 = vadd.f32 %v941, %v1269
          %v1278 = vadd.f32 %v942, %v1270
          %v1279 = vadd.f32 %v943, %v1271
          %v1280 = vadd.f32 %v944, %v1272
          %v1281 = vadd.f32 %v945, %v1273
          %v1282 = vadd.f32 %v946, %v1274
          %v1283 = vadd.f32 %v947, %v1275
          %s1284 = scalar_lea.vmem [#allocation8], 128
          %v1285 = vld [vmem:[%s1284] sm:$0xf]
          %v1286 = vld [vmem:[%s1284 + $0x4] sm:$0xf]
          %v1287 = vld [vmem:[%s1284 + $0x8] sm:$0xf]
          %v1288 = vld [vmem:[%s1284 + $0xc] sm:$0xf]
          %v1289 = vld [vmem:[%s1284 + $0x10] sm:$0xf]
          %v1290 = vld [vmem:[%s1284 + $0x14] sm:$0xf]
          %v1291 = vld [vmem:[%s1284 + $0x18] sm:$0xf]
          %v1292 = vld [vmem:[%s1284 + $0x1c] sm:$0xf]
          %v1293 = vld [vmem:[%s1284 + $0x20] sm:$0xf]
          %v1294 = vld [vmem:[%s1284 + $0x24] sm:$0xf]
          %v1295 = vld [vmem:[%s1284 + $0x28] sm:$0xf]
          %v1296 = vld [vmem:[%s1284 + $0x2c] sm:$0xf]
          %v1297 = vld [vmem:[%s1284 + $0x30] sm:$0xf]
          %v1298 = vld [vmem:[%s1284 + $0x34] sm:$0xf]
          %v1299 = vld [vmem:[%s1284 + $0x38] sm:$0xf]
          %v1300 = vld [vmem:[%s1284 + $0x3c] sm:$0xf]
          %s1301 = scalar_lea.vmem %s3, 2
          %v1302 = vld [vmem:[%s1301] sm:$0x1]
          %v1304 = vlaneseq
          %v1305 = vshrl.u32 %v1304, 7
          %v1306 = vsub.s32 0, %v1305
          %v1307 = vrot.slane %v1302, %v1306
          %v1325 = vunpack.c.l.b16 %v1285
          %v1326 = vunpack.c.l.b16 %v1286
          %v1327 = vunpack.c.l.b16 %v1287
          %v1328 = vunpack.c.l.b16 %v1288
          %v1329 = vunpack.c.l.b16 %v1289
          %v1330 = vunpack.c.l.b16 %v1290
          %v1331 = vunpack.c.l.b16 %v1291
          %v1332 = vunpack.c.l.b16 %v1292
          %v1333 = vunpack.c.l.b16 %v1293
          %v1334 = vunpack.c.l.b16 %v1294
          %v1335 = vunpack.c.l.b16 %v1295
          %v1336 = vunpack.c.l.b16 %v1296
          %v1337 = vunpack.c.l.b16 %v1297
          %v1338 = vunpack.c.l.b16 %v1298
          %v1339 = vunpack.c.l.b16 %v1299
          %v1340 = vunpack.c.l.b16 %v1300
          %v1341 = vpack.c.b16 %v1326, %v1325
          %v1342 = vpack.c.b16 %v1328, %v1327
          %v1343 = vpack.c.b16 %v1330, %v1329
          %v1344 = vpack.c.b16 %v1332, %v1331
          %v1345 = vpack.c.b16 %v1334, %v1333
          %v1346 = vpack.c.b16 %v1336, %v1335
          %v1347 = vpack.c.b16 %v1338, %v1337
          %v1348 = vpack.c.b16 %v1340, %v1339
          %1357 = vmatprep.subr.bf16.mxu0 0
          %1358 = vmatpush1.bf16.msra.mxu0 %v1341
          %1359 = vmatprep.subr.bf16.mxu0 0
          %1360 = vmatpush1.bf16.msra.mxu0 %v1342
          %1361 = vmatprep.subr.bf16.mxu0 0
          %1362 = vmatpush1.bf16.msra.mxu0 %v1343
          %1363 = vmatprep.subr.bf16.mxu0 0
          %1364 = vmatpush1.bf16.msra.mxu0 %v1344
          %1365 = vmatprep.subr.bf16.mxu0 0
          %1366 = vmatpush1.bf16.msra.mxu0 %v1345
          %1367 = vmatprep.subr.bf16.mxu0 0
          %1368 = vmatpush1.bf16.msra.mxu0 %v1346
          %1369 = vmatprep.subr.bf16.mxu0 0
          %1370 = vmatpush1.bf16.msra.mxu0 %v1347
          %1371 = vmatprep.subr.bf16.mxu0 0
          %1372 = vmatpush1.bf16.msra.mxu0 %v1348
          %1373 = vmatprep.subr.bf16.mxu0 0
          %1374 = vmatpush1.bf16.msra.mxu0 0
          %1375 = vmatprep.subr.bf16.mxu0 0
          %1376 = vmatpush1.bf16.msra.mxu0 0
          %1377 = vmatprep.subr.bf16.mxu0 0
          %1378 = vmatpush1.bf16.msra.mxu0 0
          %1379 = vmatprep.subr.bf16.mxu0 0
          %1380 = vmatpush1.bf16.msra.mxu0 0
          %1381 = vmatprep.subr.bf16.mxu0 0
          %1382 = vmatpush1.bf16.msra.mxu0 0
          %1383 = vmatprep.subr.bf16.mxu0 0
          %1384 = vmatpush1.bf16.msra.mxu0 0
          %1385 = vmatprep.subr.bf16.mxu0 0
          %1386 = vmatpush1.bf16.msra.mxu0 0
          %1387 = vmatprep.subr.bf16.mxu0 0
          %1388 = vmatpush1.bf16.msra.mxu0 0
          %1389 = vmatprep.mubr.bf16.mxu0 0
          %1390 = vmatmul.mubr.bf16.gmra.mrb[0].mxu0 %v602
          %v1391 = vpop.f32.mrb[0].mxu0
          %v1392 = vadd.f32 %v1307, %v1391
          %v1393 = vpop.f32.mrb[0].mxu0
          %v1394 = vpop.f32.mrb[0].mxu0
          %v1395 = vadd.f32 %v1307, %v1394
          %v1396 = vpop.f32.mrb[0].mxu0
          %1397 = vmatprep.mubr.bf16.mxu0 0
          %1398 = vmatmul.mubr.bf16.gmra.mrb[0].mxu0 %v603
          %v1399 = vpop.f32.mrb[0].mxu0
          %v1400 = vadd.f32 %v1307, %v1399
          %v1401 = vpop.f32.mrb[0].mxu0
          %v1402 = vpop.f32.mrb[0].mxu0
          %v1403 = vadd.f32 %v1307, %v1402
          %v1404 = vpop.f32.mrb[0].mxu0
          %1405 = vmatprep.mubr.bf16.mxu0 0
          %1406 = vmatmul.mubr.bf16.gmra.mrb[0].mxu0 %v604
          %v1407 = vpop.f32.mrb[0].mxu0
          %v1408 = vadd.f32 %v1307, %v1407
          %v1409 = vpop.f32.mrb[0].mxu0
          %v1410 = vpop.f32.mrb[0].mxu0
          %v1411 = vadd.f32 %v1307, %v1410
          %v1412 = vpop.f32.mrb[0].mxu0
          %1413 = vmatprep.mubr.bf16.mxu0 0
          %1414 = vmatmul.mubr.bf16.gmra.mrb[0].mxu0 %v605
          %v1415 = vpop.f32.mrb[0].mxu0
          %v1416 = vadd.f32 %v1307, %v1415
          %v1417 = vpop.f32.mrb[0].mxu0
          %v1418 = vpop.f32.mrb[0].mxu0
          %v1419 = vadd.f32 %v1307, %v1418
          %v1420 = vpop.f32.mrb[0].mxu0
          %1421 = vdwg.mxu0
          %v1422 = vmax.f32 %v1392, 0.0
          %v1423 = vmax.f32 %v1395, 0.0
          %v1424 = vmax.f32 %v1400, 0.0
          %v1425 = vmax.f32 %v1403, 0.0
          %v1426 = vmax.f32 %v1408, 0.0
          %v1427 = vmax.f32 %v1411, 0.0
          %v1428 = vmax.f32 %v1416, 0.0
          %v1429 = vmax.f32 %v1419, 0.0
          %v1430 = vpack.c.bf16 %v1423, %v1422
          %v1431 = vpack.c.bf16 %v1425, %v1424
          %v1432 = vpack.c.bf16 %v1427, %v1426
          %v1433 = vpack.c.bf16 %v1429, %v1428
          %s1434 = scalar_lea.vmem [#allocation9], 128
          %v1435 = vld [vmem:[%s1434] sm:$0xf]
          %v1436 = vld [vmem:[%s1434 + $0x4] sm:$0xf]
          %v1437 = vld [vmem:[%s1434 + $0x8] sm:$0xf]
          %v1438 = vld [vmem:[%s1434 + $0xc] sm:$0xf]
          %v1439 = vld [vmem:[%s1434 + $0x10] sm:$0xf]
          %v1440 = vld [vmem:[%s1434 + $0x14] sm:$0xf]
          %v1441 = vld [vmem:[%s1434 + $0x18] sm:$0xf]
          %v1442 = vld [vmem:[%s1434 + $0x1c] sm:$0xf]
          %v1443 = vld [vmem:[%s1434 + $0x20] sm:$0xf]
          %v1444 = vld [vmem:[%s1434 + $0x24] sm:$0xf]
          %v1445 = vld [vmem:[%s1434 + $0x28] sm:$0xf]
          %v1446 = vld [vmem:[%s1434 + $0x2c] sm:$0xf]
          %v1447 = vld [vmem:[%s1434 + $0x30] sm:$0xf]
          %v1448 = vld [vmem:[%s1434 + $0x34] sm:$0xf]
          %v1449 = vld [vmem:[%s1434 + $0x38] sm:$0xf]
          %v1450 = vld [vmem:[%s1434 + $0x3c] sm:$0xf]
          %v1467 = vunpack.c.l.b16 %v1435
          %v1468 = vunpack.c.l.b16 %v1436
          %v1469 = vunpack.c.l.b16 %v1437
          %v1470 = vunpack.c.l.b16 %v1438
          %v1471 = vunpack.c.l.b16 %v1439
          %v1472 = vunpack.c.l.b16 %v1440
          %v1473 = vunpack.c.l.b16 %v1441
          %v1474 = vunpack.c.l.b16 %v1442
          %v1475 = vunpack.c.l.b16 %v1443
          %v1476 = vunpack.c.l.b16 %v1444
          %v1477 = vunpack.c.l.b16 %v1445
          %v1478 = vunpack.c.l.b16 %v1446
          %v1479 = vunpack.c.l.b16 %v1447
          %v1480 = vunpack.c.l.b16 %v1448
          %v1481 = vunpack.c.l.b16 %v1449
          %v1482 = vunpack.c.l.b16 %v1450
          %v1483 = vpack.c.b16 %v1468, %v1467
          %v1484 = vpack.c.b16 %v1470, %v1469
          %v1485 = vpack.c.b16 %v1472, %v1471
          %v1486 = vpack.c.b16 %v1474, %v1473
          %v1487 = vpack.c.b16 %v1476, %v1475
          %v1488 = vpack.c.b16 %v1478, %v1477
          %v1489 = vpack.c.b16 %v1480, %v1479
          %v1490 = vpack.c.b16 %v1482, %v1481
          %1499 = vmatprep.subr.bf16.mxu0 0
          %1500 = vmatpush1.bf16.msra.mxu0 %v1483
          %1501 = vmatprep.subr.bf16.mxu0 0
          %1502 = vmatpush1.bf16.msra.mxu0 %v1484
          %1503 = vmatprep.subr.bf16.mxu0 0
          %1504 = vmatpush1.bf16.msra.mxu0 %v1485
          %1505 = vmatprep.subr.bf16.mxu0 0
          %1506 = vmatpush1.bf16.msra.mxu0 %v1486
          %1507 = vmatprep.subr.bf16.mxu0 0
          %1508 = vmatpush1.bf16.msra.mxu0 %v1487
          %1509 = vmatprep.subr.bf16.mxu0 0
          %1510 = vmatpush1.bf16.msra.mxu0 %v1488
          %1511 = vmatprep.subr.bf16.mxu0 0
          %1512 = vmatpush1.bf16.msra.mxu0 %v1489
          %1513 = vmatprep.subr.bf16.mxu0 0
          %1514 = vmatpush1.bf16.msra.mxu0 %v1490
          %1515 = vmatprep.subr.bf16.mxu0 0
          %1516 = vmatpush1.bf16.msra.mxu0 0
          %1517 = vmatprep.subr.bf16.mxu0 0
          %1518 = vmatpush1.bf16.msra.mxu0 0
          %1519 = vmatprep.subr.bf16.mxu0 0
          %1520 = vmatpush1.bf16.msra.mxu0 0
          %1521 = vmatprep.subr.bf16.mxu0 0
          %1522 = vmatpush1.bf16.msra.mxu0 0
          %1523 = vmatprep.subr.bf16.mxu0 0
          %1524 = vmatpush1.bf16.msra.mxu0 0
          %1525 = vmatprep.subr.bf16.mxu0 0
          %1526 = vmatpush1.bf16.msra.mxu0 0
          %1527 = vmatprep.subr.bf16.mxu0 0
          %1528 = vmatpush1.bf16.msra.mxu0 0
          %1529 = vmatprep.subr.bf16.mxu0 0
          %1530 = vmatpush1.bf16.msra.mxu0 0
          %1531 = vmatprep.mubr.bf16.mxu0 0
          %1532 = vmatmul.mubr.bf16.gmra.mrb[0].mxu0 %v1430
          %v1533 = vpop.f32.mrb[0].mxu0
          %v1534 = vadd.f32 0.0, %v1533
          %v1535 = vpop.f32.mrb[0].mxu0
          %v1536 = vpop.f32.mrb[0].mxu0
          %v1537 = vadd.f32 0.0, %v1536
          %v1538 = vpop.f32.mrb[0].mxu0
          %1539 = vmatprep.mubr.bf16.mxu0 0
          %1540 = vmatmul.mubr.bf16.gmra.mrb[0].mxu0 %v1431
          %v1541 = vpop.f32.mrb[0].mxu0
          %v1542 = vadd.f32 0.0, %v1541
          %v1543 = vpop.f32.mrb[0].mxu0
          %v1544 = vpop.f32.mrb[0].mxu0
          %v1545 = vadd.f32 0.0, %v1544
          %v1546 = vpop.f32.mrb[0].mxu0
          %1547 = vmatprep.mubr.bf16.mxu0 0
          %1548 = vmatmul.mubr.bf16.gmra.mrb[0].mxu0 %v1432
          %v1549 = vpop.f32.mrb[0].mxu0
          %v1550 = vadd.f32 0.0, %v1549
          %v1551 = vpop.f32.mrb[0].mxu0
          %v1552 = vpop.f32.mrb[0].mxu0
          %v1553 = vadd.f32 0.0, %v1552
          %v1554 = vpop.f32.mrb[0].mxu0
          %1555 = vmatprep.mubr.bf16.mxu0 0
          %1556 = vmatmul.mubr.bf16.gmra.mrb[0].mxu0 %v1433
          %v1557 = vpop.f32.mrb[0].mxu0
          %v1558 = vadd.f32 0.0, %v1557
          %v1559 = vpop.f32.mrb[0].mxu0
          %v1560 = vpop.f32.mrb[0].mxu0
          %v1561 = vadd.f32 0.0, %v1560
          %v1562 = vpop.f32.mrb[0].mxu0
          %1563 = vdwg.mxu0
          %vm1564 = vcmp.ge.s32.totalorder %v607, 5
          %vm1565 = vcmp.ge.s32.totalorder %v608, 5
          %vm1566 = vcmp.ge.s32.totalorder %v609, 5
          %vm1567 = vcmp.ge.s32.totalorder %v610, 5
          %vm1568 = vcmp.ge.s32.totalorder %v611, 5
          %vm1569 = vcmp.ge.s32.totalorder %v612, 5
          %vm1570 = vcmp.ge.s32.totalorder %v613, 5
          %vm1571 = vcmp.ge.s32.totalorder %v614, 5
          %vm1572 = vcmp.lt.s32.totalorder %v607, 14
          %vm1573 = vcmp.lt.s32.totalorder %v608, 14
          %vm1574 = vcmp.lt.s32.totalorder %v609, 14
          %vm1575 = vcmp.lt.s32.totalorder %v610, 14
          %vm1576 = vcmp.lt.s32.totalorder %v611, 14
          %vm1577 = vcmp.lt.s32.totalorder %v612, 14
          %vm1578 = vcmp.lt.s32.totalorder %v613, 14
          %vm1579 = vcmp.lt.s32.totalorder %v614, 14
          %vm1580 = vmand %vm1564, %vm1572
          %vm1581 = vmand %vm1565, %vm1573
          %vm1582 = vmand %vm1566, %vm1574
          %vm1583 = vmand %vm1567, %vm1575
          %vm1584 = vmand %vm1568, %vm1576
          %vm1585 = vmand %vm1569, %vm1577
          %vm1586 = vmand %vm1570, %vm1578
          %vm1587 = vmand %vm1571, %vm1579
          %v1588 = vsel %vm1580, 1, 0
          %v1589 = vsel %vm1581, 1, 0
          %v1590 = vsel %vm1582, 1, 0
          %v1591 = vsel %vm1583, 1, 0
          %v1592 = vsel %vm1584, 1, 0
          %v1593 = vsel %vm1585, 1, 0
          %v1594 = vsel %vm1586, 1, 0
          %v1595 = vsel %vm1587, 1, 0
          %vm1596 = vcmp.eq.s32.totalorder %v1588, 1
          %vm1597 = vcmp.eq.s32.totalorder %v1589, 1
          %vm1598 = vcmp.eq.s32.totalorder %v1590, 1
          %vm1599 = vcmp.eq.s32.totalorder %v1591, 1
          %vm1600 = vcmp.eq.s32.totalorder %v1592, 1
          %vm1601 = vcmp.eq.s32.totalorder %v1593, 1
          %vm1602 = vcmp.eq.s32.totalorder %v1594, 1
          %vm1603 = vcmp.eq.s32.totalorder %v1595, 1
          %v1604 = vsel %vm1596, %v1534, 0.0
          %v1605 = vsel %vm1597, %v1537, 0.0
          %v1606 = vsel %vm1598, %v1542, 0.0
          %v1607 = vsel %vm1599, %v1545, 0.0
          %v1608 = vsel %vm1600, %v1550, 0.0
          %v1609 = vsel %vm1601, %v1553, 0.0
          %v1610 = vsel %vm1602, %v1558, 0.0
          %v1611 = vsel %vm1603, %v1561, 0.0
          %v1612 = vadd.f32 %v1276, %v1604
          %v1613 = vadd.f32 %v1277, %v1605
          %v1614 = vadd.f32 %v1278, %v1606
          %v1615 = vadd.f32 %v1279, %v1607
          %v1616 = vadd.f32 %v1280, %v1608
          %v1617 = vadd.f32 %v1281, %v1609
          %v1618 = vadd.f32 %v1282, %v1610
          %v1619 = vadd.f32 %v1283, %v1611
          %s1620 = scalar_lea.vmem [#allocation8], 192
          %v1621 = vld [vmem:[%s1620] sm:$0xf]
          %v1622 = vld [vmem:[%s1620 + $0x4] sm:$0xf]
          %v1623 = vld [vmem:[%s1620 + $0x8] sm:$0xf]
          %v1624 = vld [vmem:[%s1620 + $0xc] sm:$0xf]
          %v1625 = vld [vmem:[%s1620 + $0x10] sm:$0xf]
          %v1626 = vld [vmem:[%s1620 + $0x14] sm:$0xf]
          %v1627 = vld [vmem:[%s1620 + $0x18] sm:$0xf]
          %v1628 = vld [vmem:[%s1620 + $0x1c] sm:$0xf]
          %v1629 = vld [vmem:[%s1620 + $0x20] sm:$0xf]
          %v1630 = vld [vmem:[%s1620 + $0x24] sm:$0xf]
          %v1631 = vld [vmem:[%s1620 + $0x28] sm:$0xf]
          %v1632 = vld [vmem:[%s1620 + $0x2c] sm:$0xf]
          %v1633 = vld [vmem:[%s1620 + $0x30] sm:$0xf]
          %v1634 = vld [vmem:[%s1620 + $0x34] sm:$0xf]
          %v1635 = vld [vmem:[%s1620 + $0x38] sm:$0xf]
          %v1636 = vld [vmem:[%s1620 + $0x3c] sm:$0xf]
          %s1637 = scalar_lea.vmem %s3, 3
          %v1638 = vld [vmem:[%s1637] sm:$0x1]
          %v1640 = vlaneseq
          %v1641 = vshrl.u32 %v1640, 7
          %v1642 = vsub.s32 0, %v1641
          %v1643 = vrot.slane %v1638, %v1642
          %v1661 = vunpack.c.l.b16 %v1621
          %v1662 = vunpack.c.l.b16 %v1622
          %v1663 = vunpack.c.l.b16 %v1623
          %v1664 = vunpack.c.l.b16 %v1624
          %v1665 = vunpack.c.l.b16 %v1625
          %v1666 = vunpack.c.l.b16 %v1626
          %v1667 = vunpack.c.l.b16 %v1627
          %v1668 = vunpack.c.l.b16 %v1628
          %v1669 = vunpack.c.l.b16 %v1629
          %v1670 = vunpack.c.l.b16 %v1630
          %v1671 = vunpack.c.l.b16 %v1631
          %v1672 = vunpack.c.l.b16 %v1632
          %v1673 = vunpack.c.l.b16 %v1633
          %v1674 = vunpack.c.l.b16 %v1634
          %v1675 = vunpack.c.l.b16 %v1635
          %v1676 = vunpack.c.l.b16 %v1636
          %v1677 = vpack.c.b16 %v1662, %v1661
          %v1678 = vpack.c.b16 %v1664, %v1663
          %v1679 = vpack.c.b16 %v1666, %v1665
          %v1680 = vpack.c.b16 %v1668, %v1667
          %v1681 = vpack.c.b16 %v1670, %v1669
          %v1682 = vpack.c.b16 %v1672, %v1671
          %v1683 = vpack.c.b16 %v1674, %v1673
          %v1684 = vpack.c.b16 %v1676, %v1675
          %1693 = vmatprep.subr.bf16.mxu0 0
          %1694 = vmatpush1.bf16.msra.mxu0 %v1677
          %1695 = vmatprep.subr.bf16.mxu0 0
          %1696 = vmatpush1.bf16.msra.mxu0 %v1678
          %1697 = vmatprep.subr.bf16.mxu0 0
          %1698 = vmatpush1.bf16.msra.mxu0 %v1679
          %1699 = vmatprep.subr.bf16.mxu0 0
          %1700 = vmatpush1.bf16.msra.mxu0 %v1680
          %1701 = vmatprep.subr.bf16.mxu0 0
          %1702 = vmatpush1.bf16.msra.mxu0 %v1681
          %1703 = vmatprep.subr.bf16.mxu0 0
          %1704 = vmatpush1.bf16.msra.mxu0 %v1682
          %1705 = vmatprep.subr.bf16.mxu0 0
          %1706 = vmatpush1.bf16.msra.mxu0 %v1683
          %1707 = vmatprep.subr.bf16.mxu0 0
          %1708 = vmatpush1.bf16.msra.mxu0 %v1684
          %1709 = vmatprep.subr.bf16.mxu0 0
          %1710 = vmatpush1.bf16.msra.mxu0 0
          %1711 = vmatprep.subr.bf16.mxu0 0
          %1712 = vmatpush1.bf16.msra.mxu0 0
          %1713 = vmatprep.subr.bf16.mxu0 0
          %1714 = vmatpush1.bf16.msra.mxu0 0
          %1715 = vmatprep.subr.bf16.mxu0 0
          %1716 = vmatpush1.bf16.msra.mxu0 0
          %1717 = vmatprep.subr.bf16.mxu0 0
          %1718 = vmatpush1.bf16.msra.mxu0 0
          %1719 = vmatprep.subr.bf16.mxu0 0
          %1720 = vmatpush1.bf16.msra.mxu0 0
          %1721 = vmatprep.subr.bf16.mxu0 0
          %1722 = vmatpush1.bf16.msra.mxu0 0
          %1723 = vmatprep.subr.bf16.mxu0 0
          %1724 = vmatpush1.bf16.msra.mxu0 0
          %1725 = vmatprep.mubr.bf16.mxu0 0
          %1726 = vmatmul.mubr.bf16.gmra.mrb[0].mxu0 %v602
          %v1727 = vpop.f32.mrb[0].mxu0
          %v1728 = vadd.f32 %v1643, %v1727
          %v1729 = vpop.f32.mrb[0].mxu0
          %v1730 = vpop.f32.mrb[0].mxu0
          %v1731 = vadd.f32 %v1643, %v1730
          %v1732 = vpop.f32.mrb[0].mxu0
          %1733 = vmatprep.mubr.bf16.mxu0 0
          %1734 = vmatmul.mubr.bf16.gmra.mrb[0].mxu0 %v603
          %v1735 = vpop.f32.mrb[0].mxu0
          %v1736 = vadd.f32 %v1643, %v1735
          %v1737 = vpop.f32.mrb[0].mxu0
          %v1738 = vpop.f32.mrb[0].mxu0
          %v1739 = vadd.f32 %v1643, %v1738
          %v1740 = vpop.f32.mrb[0].mxu0
          %1741 = vmatprep.mubr.bf16.mxu0 0
          %1742 = vmatmul.mubr.bf16.gmra.mrb[0].mxu0 %v604
          %v1743 = vpop.f32.mrb[0].mxu0
          %v1744 = vadd.f32 %v1643, %v1743
          %v1745 = vpop.f32.mrb[0].mxu0
          %v1746 = vpop.f32.mrb[0].mxu0
          %v1747 = vadd.f32 %v1643, %v1746
          %v1748 = vpop.f32.mrb[0].mxu0
          %1749 = vmatprep.mubr.bf16.mxu0 0
          %1750 = vmatmul.mubr.bf16.gmra.mrb[0].mxu0 %v605
          %v1751 = vpop.f32.mrb[0].mxu0
          %v1752 = vadd.f32 %v1643, %v1751
          %v1753 = vpop.f32.mrb[0].mxu0
          %v1754 = vpop.f32.mrb[0].mxu0
          %v1755 = vadd.f32 %v1643, %v1754
          %v1756 = vpop.f32.mrb[0].mxu0
          %1757 = vdwg.mxu0
          %v1758 = vmax.f32 %v1728, 0.0
          %v1759 = vmax.f32 %v1731, 0.0
          %v1760 = vmax.f32 %v1736, 0.0
          %v1761 = vmax.f32 %v1739, 0.0
          %v1762 = vmax.f32 %v1744, 0.0
          %v1763 = vmax.f32 %v1747, 0.0
          %v1764 = vmax.f32 %v1752, 0.0
          %v1765 = vmax.f32 %v1755, 0.0
          %v1766 = vpack.c.bf16 %v1759, %v1758
          %v1767 = vpack.c.bf16 %v1761, %v1760
          %v1768 = vpack.c.bf16 %v1763, %v1762
          %v1769 = vpack.c.bf16 %v1765, %v1764
          %s1770 = scalar_lea.vmem [#allocation9], 192
          %v1771 = vld [vmem:[%s1770] sm:$0xf]
          %v1772 = vld [vmem:[%s1770 + $0x4] sm:$0xf]
          %v1773 = vld [vmem:[%s1770 + $0x8] sm:$0xf]
          %v1774 = vld [vmem:[%s1770 + $0xc] sm:$0xf]
          %v1775 = vld [vmem:[%s1770 + $0x10] sm:$0xf]
          %v1776 = vld [vmem:[%s1770 + $0x14] sm:$0xf]
          %v1777 = vld [vmem:[%s1770 + $0x18] sm:$0xf]
          %v1778 = vld [vmem:[%s1770 + $0x1c] sm:$0xf]
          %v1779 = vld [vmem:[%s1770 + $0x20] sm:$0xf]
          %v1780 = vld [vmem:[%s1770 + $0x24] sm:$0xf]
          %v1781 = vld [vmem:[%s1770 + $0x28] sm:$0xf]
          %v1782 = vld [vmem:[%s1770 + $0x2c] sm:$0xf]
          %v1783 = vld [vmem:[%s1770 + $0x30] sm:$0xf]
          %v1784 = vld [vmem:[%s1770 + $0x34] sm:$0xf]
          %v1785 = vld [vmem:[%s1770 + $0x38] sm:$0xf]
          %v1786 = vld [vmem:[%s1770 + $0x3c] sm:$0xf]
          %v1803 = vunpack.c.l.b16 %v1771
          %v1804 = vunpack.c.l.b16 %v1772
          %v1805 = vunpack.c.l.b16 %v1773
          %v1806 = vunpack.c.l.b16 %v1774
          %v1807 = vunpack.c.l.b16 %v1775
          %v1808 = vunpack.c.l.b16 %v1776
          %v1809 = vunpack.c.l.b16 %v1777
          %v1810 = vunpack.c.l.b16 %v1778
          %v1811 = vunpack.c.l.b16 %v1779
          %v1812 = vunpack.c.l.b16 %v1780
          %v1813 = vunpack.c.l.b16 %v1781
          %v1814 = vunpack.c.l.b16 %v1782
          %v1815 = vunpack.c.l.b16 %v1783
          %v1816 = vunpack.c.l.b16 %v1784
          %v1817 = vunpack.c.l.b16 %v1785
          %v1818 = vunpack.c.l.b16 %v1786
          %v1819 = vpack.c.b16 %v1804, %v1803
          %v1820 = vpack.c.b16 %v1806, %v1805
          %v1821 = vpack.c.b16 %v1808, %v1807
          %v1822 = vpack.c.b16 %v1810, %v1809
          %v1823 = vpack.c.b16 %v1812, %v1811
          %v1824 = vpack.c.b16 %v1814, %v1813
          %v1825 = vpack.c.b16 %v1816, %v1815
          %v1826 = vpack.c.b16 %v1818, %v1817
          %1835 = vmatprep.subr.bf16.mxu0 0
          %1836 = vmatpush1.bf16.msra.mxu0 %v1819
          %1837 = vmatprep.subr.bf16.mxu0 0
          %1838 = vmatpush1.bf16.msra.mxu0 %v1820
          %1839 = vmatprep.subr.bf16.mxu0 0
          %1840 = vmatpush1.bf16.msra.mxu0 %v1821
          %1841 = vmatprep.subr.bf16.mxu0 0
          %1842 = vmatpush1.bf16.msra.mxu0 %v1822
          %1843 = vmatprep.subr.bf16.mxu0 0
          %1844 = vmatpush1.bf16.msra.mxu0 %v1823
          %1845 = vmatprep.subr.bf16.mxu0 0
          %1846 = vmatpush1.bf16.msra.mxu0 %v1824
          %1847 = vmatprep.subr.bf16.mxu0 0
          %1848 = vmatpush1.bf16.msra.mxu0 %v1825
          %1849 = vmatprep.subr.bf16.mxu0 0
          %1850 = vmatpush1.bf16.msra.mxu0 %v1826
          %1851 = vmatprep.subr.bf16.mxu0 0
          %1852 = vmatpush1.bf16.msra.mxu0 0
          %1853 = vmatprep.subr.bf16.mxu0 0
          %1854 = vmatpush1.bf16.msra.mxu0 0
          %1855 = vmatprep.subr.bf16.mxu0 0
          %1856 = vmatpush1.bf16.msra.mxu0 0
          %1857 = vmatprep.subr.bf16.mxu0 0
          %1858 = vmatpush1.bf16.msra.mxu0 0
          %1859 = vmatprep.subr.bf16.mxu0 0
          %1860 = vmatpush1.bf16.msra.mxu0 0
          %1861 = vmatprep.subr.bf16.mxu0 0
          %1862 = vmatpush1.bf16.msra.mxu0 0
          %1863 = vmatprep.subr.bf16.mxu0 0
          %1864 = vmatpush1.bf16.msra.mxu0 0
          %1865 = vmatprep.subr.bf16.mxu0 0
          %1866 = vmatpush1.bf16.msra.mxu0 0
          %1867 = vmatprep.mubr.bf16.mxu0 0
          %1868 = vmatmul.mubr.bf16.gmra.mrb[0].mxu0 %v1766
          %v1869 = vpop.f32.mrb[0].mxu0
          %v1870 = vadd.f32 0.0, %v1869
          %v1871 = vpop.f32.mrb[0].mxu0
          %v1872 = vpop.f32.mrb[0].mxu0
          %v1873 = vadd.f32 0.0, %v1872
          %v1874 = vpop.f32.mrb[0].mxu0
          %1875 = vmatprep.mubr.bf16.mxu0 0
          %1876 = vmatmul.mubr.bf16.gmra.mrb[0].mxu0 %v1767
          %v1877 = vpop.f32.mrb[0].mxu0
          %v1878 = vadd.f32 0.0, %v1877
          %v1879 = vpop.f32.mrb[0].mxu0
          %v1880 = vpop.f32.mrb[0].mxu0
          %v1881 = vadd.f32 0.0, %v1880
          %v1882 = vpop.f32.mrb[0].mxu0
          %1883 = vmatprep.mubr.bf16.mxu0 0
          %1884 = vmatmul.mubr.bf16.gmra.mrb[0].mxu0 %v1768
          %v1885 = vpop.f32.mrb[0].mxu0
          %v1886 = vadd.f32 0.0, %v1885
          %v1887 = vpop.f32.mrb[0].mxu0
          %v1888 = vpop.f32.mrb[0].mxu0
          %v1889 = vadd.f32 0.0, %v1888
          %v1890 = vpop.f32.mrb[0].mxu0
          %1891 = vmatprep.mubr.bf16.mxu0 0
          %1892 = vmatmul.mubr.bf16.gmra.mrb[0].mxu0 %v1769
          %v1893 = vpop.f32.mrb[0].mxu0
          %v1894 = vadd.f32 0.0, %v1893
          %v1895 = vpop.f32.mrb[0].mxu0
          %v1896 = vpop.f32.mrb[0].mxu0
          %v1897 = vadd.f32 0.0, %v1896
          %v1898 = vpop.f32.mrb[0].mxu0
          %1899 = vdwg.mxu0
          %vm1900 = vcmp.ge.s32.totalorder %v607, 14
          %vm1901 = vcmp.ge.s32.totalorder %v608, 14
          %vm1902 = vcmp.ge.s32.totalorder %v609, 14
          %vm1903 = vcmp.ge.s32.totalorder %v610, 14
          %vm1904 = vcmp.ge.s32.totalorder %v611, 14
          %vm1905 = vcmp.ge.s32.totalorder %v612, 14
          %vm1906 = vcmp.ge.s32.totalorder %v613, 14
          %vm1907 = vcmp.ge.s32.totalorder %v614, 14
          %vm1908 = vcmp.lt.s32.totalorder %v607, 50
          %vm1909 = vcmp.lt.s32.totalorder %v608, 50
          %vm1910 = vcmp.lt.s32.totalorder %v609, 50
          %vm1911 = vcmp.lt.s32.totalorder %v610, 50
          %vm1912 = vcmp.lt.s32.totalorder %v611, 50
          %vm1913 = vcmp.lt.s32.totalorder %v612, 50
          %vm1914 = vcmp.lt.s32.totalorder %v613, 50
          %vm1915 = vcmp.lt.s32.totalorder %v614, 50
          %vm1916 = vmand %vm1900, %vm1908
          %vm1917 = vmand %vm1901, %vm1909
          %vm1918 = vmand %vm1902, %vm1910
          %vm1919 = vmand %vm1903, %vm1911
          %vm1920 = vmand %vm1904, %vm1912
          %vm1921 = vmand %vm1905, %vm1913
          %vm1922 = vmand %vm1906, %vm1914
          %vm1923 = vmand %vm1907, %vm1915
          %v1924 = vsel %vm1916, 1, 0
          %v1925 = vsel %vm1917, 1, 0
          %v1926 = vsel %vm1918, 1, 0
          %v1927 = vsel %vm1919, 1, 0
          %v1928 = vsel %vm1920, 1, 0
          %v1929 = vsel %vm1921, 1, 0
          %v1930 = vsel %vm1922, 1, 0
          %v1931 = vsel %vm1923, 1, 0
          %vm1932 = vcmp.eq.s32.totalorder %v1924, 1
          %vm1933 = vcmp.eq.s32.totalorder %v1925, 1
          %vm1934 = vcmp.eq.s32.totalorder %v1926, 1
          %vm1935 = vcmp.eq.s32.totalorder %v1927, 1
          %vm1936 = vcmp.eq.s32.totalorder %v1928, 1
          %vm1937 = vcmp.eq.s32.totalorder %v1929, 1
          %vm1938 = vcmp.eq.s32.totalorder %v1930, 1
          %vm1939 = vcmp.eq.s32.totalorder %v1931, 1
          %v1940 = vsel %vm1932, %v1870, 0.0
          %v1941 = vsel %vm1933, %v1873, 0.0
          %v1942 = vsel %vm1934, %v1878, 0.0
          %v1943 = vsel %vm1935, %v1881, 0.0
          %v1944 = vsel %vm1936, %v1886, 0.0
          %v1945 = vsel %vm1937, %v1889, 0.0
          %v1946 = vsel %vm1938, %v1894, 0.0
          %v1947 = vsel %vm1939, %v1897, 0.0
          %v1948 = vadd.f32 %v1612, %v1940
          %v1949 = vadd.f32 %v1613, %v1941
          %v1950 = vadd.f32 %v1614, %v1942
          %v1951 = vadd.f32 %v1615, %v1943
          %v1952 = vadd.f32 %v1616, %v1944
          %v1953 = vadd.f32 %v1617, %v1945
          %v1954 = vadd.f32 %v1618, %v1946
          %v1955 = vadd.f32 %v1619, %v1947
          %v1956 = vpack.c.bf16 %v1949, %v1948
          %v1957 = vpack.c.bf16 %v1951, %v1950
          %v1958 = vpack.c.bf16 %v1953, %v1952
          %v1959 = vpack.c.bf16 %v1955, %v1954
          %v1964 = vunpack.c.l.b16 %v1956
          %v1965 = vunpack.c.h.b16 %v1956
          %v1966 = vunpack.c.l.b16 %v1957
          %v1967 = vunpack.c.h.b16 %v1957
          %v1968 = vunpack.c.l.b16 %v1958
          %v1969 = vunpack.c.h.b16 %v1958
          %v1970 = vunpack.c.l.b16 %v1959
          %v1971 = vunpack.c.h.b16 %v1959
          %v1972 = vpack.c.b16 %v1964, %v1964
          %v1973 = vpack.c.b16 %v1965, %v1965
          %v1974 = vpack.c.b16 %v1966, %v1966
          %v1975 = vpack.c.b16 %v1967, %v1967
          %v1976 = vpack.c.b16 %v1968, %v1968
          %v1977 = vpack.c.b16 %v1969, %v1969
          %v1978 = vpack.c.b16 %v1970, %v1970
          %v1979 = vpack.c.b16 %v1971, %v1971
          %1988 = vst [vmem:[%s310] sm:$0xf] %v1972
          %1989 = vst [vmem:[%s310 + $0x4] sm:$0xf] %v1973
          %1990 = vst [vmem:[%s310 + $0x8] sm:$0xf] %v1974
          %1991 = vst [vmem:[%s310 + $0xc] sm:$0xf] %v1975
          %1992 = vst [vmem:[%s310 + $0x10] sm:$0xf] %v1976
          %1993 = vst [vmem:[%s310 + $0x14] sm:$0xf] %v1977
          %1994 = vst [vmem:[%s310 + $0x18] sm:$0xf] %v1978
          %1995 = vst [vmem:[%s310 + $0x1c] sm:$0xf] %v1979
        $region64: #{tpu_custom_call.1} parent=39 // pred_fallthru
          _
        %s1996 = sand.u32 %s161, 1
        %s1997 = scalar_lea.sflag [#allocation5], %s1996
        %s1998 = sand.u32 %s161, 1
        %s1999 = smul.addr %s1998, 32
        %s2000 = scalar_lea.vmem [#allocation11], %s1999
        // Predicated region
        $region65: #{tpu_custom_call.1} parent=39 // pred_check
          %p2001 = pneg %p171
        $region66: #{tpu_custom_call.1} parent=39 // pred_check_branch
          %2003 = sbr.rel (%p2001) target = $region68
        $region67: #{tpu_custom_call.1} parent=39 // pred_region
          %s2005 = ssub.s32 512, 512
          %2006 = vsyncadd %s1997, %s2005
          %s2007 = smul.addr %s28, 8
          %s2008 = smul.addr %s2007, 64
          %s2009 = scalar_lea.hbm %s5, %s2008
          %s2010 = sshll.u32 %s2000, 4
          %s2011 = int_to_ptr.vmem [resolvable:$true] %s2010
          %2016 = dma.vmem_to_hbm [thread:$0]  %s2011, 512, %s2009, %s1997, 64, 64, 4
        $region68: #{tpu_custom_call.1} parent=39 // pred_fallthru
          _
      $region40: #{tpu_custom_call.1} parent=5 // pred_fallthru
        _
      %p2017 = scmp.le.s32.totalorder 2, %s19
      // Predicated region
      $region69: #{tpu_custom_call.1} parent=5 // pred_check
        %p2018 = pneg %p2017
      $region70: #{tpu_custom_call.1} parent=5 // pred_check_branch
        %2020 = sbr.rel (%p2018) target = $region72
      $region71: #{tpu_custom_call.1} parent=5 // pred_region
        %s2021 = ssub.s32 %s19, 2
        // Predicated region
        $region73: #{tpu_custom_call.1} parent=71 // pred_check
          %p2022 = pneg %p177
        $region74: #{tpu_custom_call.1} parent=71 // pred_check_branch
          %2024 = sbr.rel (%p2022) target = $region76
        $region75: #{tpu_custom_call.1} parent=71 // pred_region
          %s2025 = sand.u32 %s162, 1
          %s2026 = scalar_lea.sflag [#allocation5], %s2025
          %s2027 = sand.u32 %s162, 1
          %s2028 = smul.addr %s2027, 32
          %s2029 = scalar_lea.vmem [#allocation11], %s2028
          %2030 = dma.done %s2026, 512
        $region76: #{tpu_custom_call.1} parent=71 // pred_fallthru
          _
      $region72: #{tpu_custom_call.1} parent=5 // pred_fallthru
        _
    $region6: #{tpu_custom_call.1} parent=1 // loop_footer
      %s23 = sadd.s32 1, %s19
    $region7: #{tpu_custom_call.1} parent=1 // loop_footer_branch
      %18 = sbr.rel target = $region3
    $region8: #{tpu_custom_call.1} parent=1 // loop_exit
      _
    %2031 = vsyncpa [#allocation4], 1
    %s2032 = scalar_lea.sflag [#allocation4], 1
    %2033 = vsyncpa %s2032, 1
    %2034 = vsyncpa [#allocation7], 1
    %2035 = vsyncpa [#allocation10], 1
    %2036 = vsyncpa [#allocation5], 1
    %s2037 = scalar_lea.sflag [#allocation5], 1
    %2038 = vsyncpa %s2037, 1

</llo_original>
